<compile_context>
chip_gen: v7x
topology: tpu7x:2x2x1
jax: 0.10.0
libtpu: 0.0.40
codegen_flags: <defaults>
</compile_context>

<pallas_src>
import jax
import jax.numpy as jnp
from jax.experimental import pallas as pl
from jax.experimental.pallas import tpu as pltpu

K_NEIGHBORS = 5
NUM_FEATURES = 3          # in_channels
NUM_POINTS = 100
HIDDEN = 32               # hidden_channels
OUT_CHANNELS = 3          # out_channels (deformation vector)
BATCH = 4                 # graphs in the batch
BT = 2                    # graphs per grid step (stacked node axis M = BT*NP)

# padded sizes (TPU friendly)
NP = 128                  # padded node count   (sublane / MXU row tile)
ICP = 8                   # padded in_channels  (tiny K; no 128-lane inflation)
HP = 128                  # padded hidden       (lane-dense intermediates)
OCP = 128                 # padded out_channels (lane-dense output store)

assert BATCH % BT == 0


# ----------------------------- Pallas kernel --------------------------------
def _aggregate(a_ref, h):
    """Per-graph A_hat @ h over the stacked (BT*NP, HP) node axis.

    bf16 MXU operands, f32 accumulation.  a_ref is re-read per graph / per use
    (not hoisted) so a full f32 A tile never stays pinned across the body.
    Static unroll over BT: each dot is a native 128x128 MXU tile."""
    outs = []
    for b in range(BT):
        a_b = a_ref[b].astype(jnp.bfloat16)                       # (NP, NP)
        h_b = h[b * NP:(b + 1) * NP, :].astype(jnp.bfloat16)      # (NP, HP)
        outs.append(jnp.dot(a_b, h_b, preferred_element_type=jnp.float32))
    return jnp.concatenate(outs, axis=0)                          # (BT*NP, HP)


def _gnn_kernel(a_ref, x_ref, w1_ref, b1_ref, w2_ref, b2_ref,
                wfc_ref, bfc_ref, o_ref):
    bf16 = jnp.bfloat16
    f32 = jnp.float32

    # GCNConv 1:  relu(A_hat @ (X W1) + b1)        (X@W1 on M = BT*NP = 256)
    h = jnp.dot(x_ref[...].astype(bf16), w1_ref[...].astype(bf16),
                preferred_element_type=f32)                      # (BT*NP, HP)
    h = jnp.maximum(_aggregate(a_ref, h) + b1_ref[...], 0.0)

    # GCNConv 2:  relu(A_hat @ (H W2) + b2)
    h = jnp.dot(h.astype(bf16), w2_ref[...].astype(bf16),
                preferred_element_type=f32)                      # (BT*NP, HP)
    h = jnp.maximum(_aggregate(a_ref, h) + b2_ref[...], 0.0)

    # Linear head — lane-dense 128-wide bf16 store (real cols sliced outside)
    out = jnp.dot(h.astype(bf16), wfc_ref[...].astype(bf16),
                  preferred_element_type=f32) + bfc_ref[...]     # (BT*NP, OCP)
    o_ref[...] = out.astype(o_ref.dtype)


def deformation_gnn_forward(a_hat_p, x_stack, padded_params):
    """a_hat_p: (B, NP, NP) f32 padded normalized adjacency.
    x_stack:  (B*NP, ICP) f32 node features, batch flattened into the node axis.
    padded_params: pre-padded weights (see pad_params).
    Returns (B*NP, OCP) bf16 (pad columns are garbage-free zeros+bias)."""
    w1_p, b1_p, w2_p, b2_p, wfc_p, bfc_p = padded_params
    B = a_hat_p.shape[0]
    assert B % BT == 0 and x_stack.shape == (B * NP, ICP)

    # advisory cost hint for XLA scheduling
    flops = B * (2 * NP * ICP * HP + 4 * NP * NP * HP
                 + 2 * NP * HP * HP + 2 * NP * HP * OCP)
    bytes_accessed = (4 * B * NP * NP + 4 * B * NP * ICP + 2 * B * NP * OCP
                      + 4 * (ICP * HP + HP + HP * HP + HP + HP * OCP + OCP))

    grid_spec = pltpu.PrefetchScalarGridSpec(
        num_scalar_prefetch=0,
        grid=(B // BT,),
        in_specs=[
            # per-step tensors: BT graphs per grid step
            pl.BlockSpec((BT, NP, NP), lambda g: (g, 0, 0)),     # A_hat
            pl.BlockSpec((BT * NP, ICP), lambda g: (g, 0)),      # X (stacked)
            # weights: constant index_map -> resident, DMA'd once
            pl.BlockSpec((ICP, HP), lambda g: (0, 0)),           # W1
            pl.BlockSpec((1, HP), lambda g: (0, 0)),             # b1
            pl.BlockSpec((HP, HP), lambda g: (0, 0)),            # W2
            pl.BlockSpec((1, HP), lambda g: (0, 0)),             # b2
            pl.BlockSpec((HP, OCP), lambda g: (0, 0)),           # Wfc
            pl.BlockSpec((1, OCP), lambda g: (0, 0)),            # bfc
        ],
        out_specs=pl.BlockSpec((BT * NP, OCP), lambda g: (g, 0)),
    )

    return pl.pallas_call(
        _gnn_kernel,
        out_shape=jax.ShapeDtypeStruct((B * NP, OCP), jnp.bfloat16),
        grid_spec=grid_spec,
        compiler_params=pltpu.CompilerParams(
            dimension_semantics=("parallel",)),
        cost_estimate=pl.CostEstimate(
            flops=flops, transcendentals=0, bytes_accessed=bytes_accessed),
    )(a_hat_p, x_stack, w1_p, b1_p, w2_p, b2_p, wfc_p, bfc_p)


# ------------------------------ graph glue -----------------------------------
def knn_edge_index(x, k):
    """PyG-style knn_graph: edge_index[0]=source(neighbor), [1]=target(center).
    lax.top_k instead of a full argsort (wrapper critical-path win)."""
    n = x.shape[0]
    d2 = jnp.sum((x[:, None, :] - x[None, :, :]) ** 2, axis=-1)
    d2 = d2 + jnp.eye(n, dtype=d2.dtype) * 1e10           # exclude self
    _, nbrs = jax.lax.top_k(-d2, k)                        # (n, k) sources
    centers = jnp.repeat(jnp.arange(n), k)                 # targets
    return jnp.stack([nbrs.reshape(-1), centers], axis=0)  # (2, n*k)


def build_padded_graph(x):
    """Build A_hat at padded size (NP, NP) and X at (NP, ICP).
    Padded diag entries of A_hat are 1 (self-loop only) -> inert for real rows."""
    n, ic = x.shape
    edge_index = knn_edge_index(x, K_NEIGHBORS)
    src, dst = edge_index[0], edge_index[1]
    adj = jnp.zeros((NP, NP), jnp.float32).at[dst, src].set(1.0)
    adj = adj + jnp.eye(NP, dtype=jnp.float32)             # self loops
    deg = jnp.sum(adj, axis=1)
    dinv = 1.0 / jnp.sqrt(deg)
    a_hat_p = adj * dinv[:, None] * dinv[None, :]
    x_p = jnp.zeros((NP, ICP), jnp.float32).at[:n, :ic].set(x)
    return a_hat_p, x_p


def init_params(key, in_ch, hid, out_ch):
    ks = jax.random.split(key, 6)
    def glorot(k, shape):
        lim = jnp.sqrt(6.0 / (shape[0] + shape[1]))
        return jax.random.uniform(k, shape, jnp.float32, -lim, lim)
    w1 = glorot(ks[0], (in_ch, hid)); b1 = jnp.zeros((hid,), jnp.float32)
    w2 = glorot(ks[1], (hid, hid));   b2 = jnp.zeros((hid,), jnp.float32)
    wfc = glorot(ks[2], (hid, out_ch))
    bfc = jax.random.uniform(ks[3], (out_ch,), jnp.float32, -0.1, 0.1)
    return (w1, b1, w2, b2, wfc, bfc)


def pad_params(params):
    """Pad weights once (outside the per-call hot path). Zeros are inert."""
    w1, b1, w2, b2, wfc, bfc = params
    ic, h = w1.shape
    oc = wfc.shape[1]
    w1_p = jnp.zeros((ICP, HP), jnp.float32).at[:ic, :h].set(w1)
    b1_p = jnp.zeros((1, HP), jnp.float32).at[0, :h].set(b1)
    w2_p = jnp.zeros((HP, HP), jnp.float32).at[:h, :h].set(w2)
    b2_p = jnp.zeros((1, HP), jnp.float32).at[0, :h].set(b2)
    wfc_p = jnp.zeros((HP, OCP), jnp.float32).at[:h, :oc].set(wfc)
    bfc_p = jnp.zeros((1, OCP), jnp.float32).at[0, :oc].set(bfc)
    return (w1_p, b1_p, w2_p, b2_p, wfc_p, bfc_p)


def reference_forward(a_hat, x, params):
    w1, b1, w2, b2, wfc, bfc = params
    h = jnp.maximum(a_hat @ (x @ w1) + b1, 0.0)
    h = jnp.maximum(a_hat @ (h @ w2) + b2, 0.0)
    return h @ wfc + bfc


if __name__ == "__main__":
    key = jax.random.PRNGKey(0)
    kx, kp = jax.random.split(key)

    # batch of B point clouds, each (NUM_POINTS, NUM_FEATURES)
    xs = jax.random.normal(kx, (BATCH, NUM_POINTS, NUM_FEATURES), jnp.float32)

    # graph construction + padding (glue, vmapped over the batch)
    a_hat_p, x_p = jax.vmap(build_padded_graph)(xs)    # (B,NP,NP), (B,NP,ICP)
    x_stack = x_p.reshape(BATCH * NP, ICP)             # batch folded into nodes

    params = init_params(kp, NUM_FEATURES, HIDDEN, OUT_CHANNELS)
    padded_params = pad_params(params)                 # hoisted, done once

    out_full = deformation_gnn_forward(a_hat_p, x_stack, padded_params)
    out_full = jax.block_until_ready(out_full)
    out = (out_full.reshape(BATCH, NP, OCP)[:, :NUM_POINTS, :OUT_CHANNELS]
           .astype(jnp.float32))                       # (B, 100, 3)

    # reference on the unpadded problem (padded A_hat restricted to real nodes
    # equals the standard GCN normalization); f32 end-to-end
    ref = jax.vmap(reference_forward, in_axes=(0, 0, None))(
        a_hat_p[:, :NUM_POINTS, :NUM_POINTS], xs, params)

    assert out.shape == (BATCH, NUM_POINTS, OUT_CHANNELS)
    # bf16 MXU operands + bf16 output store vs f32 reference
    assert jnp.allclose(out, ref, atol=2e-2, rtol=2e-2)
    print("KERNEL_OK")
</pallas_src>

<mosaic_0001>
module attributes {stable_mosaic.version = 11 : i64} {
  func.func @_gnn_kernel(%arg0: i32, %arg1: memref<2x128x128xf32, #tpu.memory_space<vmem>>, %arg2: memref<256x8xf32, #tpu.memory_space<vmem>>, %arg3: memref<8x128xf32, #tpu.memory_space<vmem>>, %arg4: memref<1x128xf32, #tpu.memory_space<vmem>>, %arg5: memref<128x128xf32, #tpu.memory_space<vmem>>, %arg6: memref<1x128xf32, #tpu.memory_space<vmem>>, %arg7: memref<128x128xf32, #tpu.memory_space<vmem>>, %arg8: memref<1x128xf32, #tpu.memory_space<vmem>>, %arg9: memref<256x128xbf16, #tpu.memory_space<vmem>>) attributes {dimension_semantics = [#tpu.dimension_semantics<parallel>], iteration_bounds = array<i64: 2>, scalar_prefetch = 0 : i64, scratch_operands = 0 : i64, tpu.core_type = #tpu.core_type<tc>, window_params = [{transform_indices = @transform_0, window_bounds = array<i64: 2, 128, 128>}, {transform_indices = @transform_1, window_bounds = array<i64: 256, 8>}, {pipeline_mode = #tpu.pipeline_mode<synchronous>, transform_indices = @transform_2, window_bounds = array<i64: 8, 128>}, {pipeline_mode = #tpu.pipeline_mode<synchronous>, transform_indices = @transform_3, window_bounds = array<i64: 1, 128>}, {pipeline_mode = #tpu.pipeline_mode<synchronous>, transform_indices = @transform_4, window_bounds = array<i64: 128, 128>}, {pipeline_mode = #tpu.pipeline_mode<synchronous>, transform_indices = @transform_5, window_bounds = array<i64: 1, 128>}, {pipeline_mode = #tpu.pipeline_mode<synchronous>, transform_indices = @transform_6, window_bounds = array<i64: 128, 128>}, {pipeline_mode = #tpu.pipeline_mode<synchronous>, transform_indices = @transform_7, window_bounds = array<i64: 1, 128>}, {transform_indices = @transform_8, window_bounds = array<i64: 256, 128>}]} {
    %c0 = arith.constant 0 : index
    %c0_0 = arith.constant 0 : index
    %0 = vector.load %arg2[%c0, %c0_0] : memref<256x8xf32, #tpu.memory_space<vmem>>, vector<256x8xf32>
    %1 = arith.truncf %0 : vector<256x8xf32> to vector<256x8xbf16>
    %c0_1 = arith.constant 0 : index
    %c0_2 = arith.constant 0 : index
    %2 = vector.load %arg3[%c0_1, %c0_2] : memref<8x128xf32, #tpu.memory_space<vmem>>, vector<8x128xf32>
    %3 = arith.truncf %2 : vector<8x128xf32> to vector<8x128xbf16>
    %cst = arith.constant dense<0.000000e+00> : vector<256x128xf32>
    %4 = tpu.matmul %1, %3, %cst {dimension_numbers = #tpu.dot_dimension_numbers<[1], [0], [0], [1], [0, 0, 1, 1], [], []>} : vector<256x8xbf16>, vector<8x128xbf16>, vector<256x128xf32> -> vector<256x128xf32>
    %c0_3 = arith.constant 0 : index
    %c0_4 = arith.constant 0 : index
    %c0_5 = arith.constant 0 : index
    %5 = vector.load %arg1[%c0_3, %c0_4, %c0_5] : memref<2x128x128xf32, #tpu.memory_space<vmem>>, vector<1x128x128xf32>
    %6 = vector.shape_cast %5 : vector<1x128x128xf32> to vector<128x128xf32>
    %7 = arith.truncf %6 : vector<128x128xf32> to vector<128x128xbf16>
    %8 = vector.extract_strided_slice %4 {offsets = [0, 0], sizes = [128, 128], strides = [1, 1]} : vector<256x128xf32> to vector<128x128xf32>
    %9 = arith.truncf %8 : vector<128x128xf32> to vector<128x128xbf16>
    %cst_6 = arith.constant dense<0.000000e+00> : vector<128x128xf32>
    %10 = tpu.matmul %7, %9, %cst_6 {dimension_numbers = #tpu.dot_dimension_numbers<[1], [0], [0], [1], [0, 0, 1, 1], [], []>} : vector<128x128xbf16>, vector<128x128xbf16>, vector<128x128xf32> -> vector<128x128xf32>
    %c1 = arith.constant 1 : index
    %c0_7 = arith.constant 0 : index
    %c0_8 = arith.constant 0 : index
    %11 = vector.load %arg1[%c1, %c0_7, %c0_8] : memref<2x128x128xf32, #tpu.memory_space<vmem>>, vector<1x128x128xf32>
    %12 = vector.shape_cast %11 : vector<1x128x128xf32> to vector<128x128xf32>
    %13 = arith.truncf %12 : vector<128x128xf32> to vector<128x128xbf16>
    %14 = vector.extract_strided_slice %4 {offsets = [128, 0], sizes = [128, 128], strides = [1, 1]} : vector<256x128xf32> to vector<128x128xf32>
    %15 = arith.truncf %14 : vector<128x128xf32> to vector<128x128xbf16>
    %cst_9 = arith.constant dense<0.000000e+00> : vector<128x128xf32>
    %16 = tpu.matmul %13, %15, %cst_9 {dimension_numbers = #tpu.dot_dimension_numbers<[1], [0], [0], [1], [0, 0, 1, 1], [], []>} : vector<128x128xbf16>, vector<128x128xbf16>, vector<128x128xf32> -> vector<128x128xf32>
    %17 = tpu.concatenate %10, %16 in 0 : vector<128x128xf32>, vector<128x128xf32> -> vector<256x128xf32>
    %c0_10 = arith.constant 0 : index
    %c0_11 = arith.constant 0 : index
    %18 = vector.load %arg4[%c0_10, %c0_11] : memref<1x128xf32, #tpu.memory_space<vmem>>, vector<1x128xf32>
    %19 = vector.broadcast %18 : vector<1x128xf32> to vector<256x128xf32>
    %20 = arith.addf %17, %19 : vector<256x128xf32>
    %cst_12 = arith.constant 0.000000e+00 : f32
    %21 = vector.broadcast %cst_12 : f32 to vector<256x128xf32>
    %22 = arith.maximumf %20, %21 : vector<256x128xf32>
    %23 = arith.truncf %22 : vector<256x128xf32> to vector<256x128xbf16>
    %c0_13 = arith.constant 0 : index
    %c0_14 = arith.constant 0 : index
    %24 = vector.load %arg5[%c0_13, %c0_14] : memref<128x128xf32, #tpu.memory_space<vmem>>, vector<128x128xf32>
    %25 = arith.truncf %24 : vector<128x128xf32> to vector<128x128xbf16>
    %cst_15 = arith.constant dense<0.000000e+00> : vector<256x128xf32>
    %26 = tpu.matmul %23, %25, %cst_15 {dimension_numbers = #tpu.dot_dimension_numbers<[1], [0], [0], [1], [0, 0, 1, 1], [], []>} : vector<256x128xbf16>, vector<128x128xbf16>, vector<256x128xf32> -> vector<256x128xf32>
    %c0_16 = arith.constant 0 : index
    %c0_17 = arith.constant 0 : index
    %c0_18 = arith.constant 0 : index
    %27 = vector.load %arg1[%c0_16, %c0_17, %c0_18] : memref<2x128x128xf32, #tpu.memory_space<vmem>>, vector<1x128x128xf32>
    %28 = vector.shape_cast %27 : vector<1x128x128xf32> to vector<128x128xf32>
    %29 = arith.truncf %28 : vector<128x128xf32> to vector<128x128xbf16>
    %30 = vector.extract_strided_slice %26 {offsets = [0, 0], sizes = [128, 128], strides = [1, 1]} : vector<256x128xf32> to vector<128x128xf32>
    %31 = arith.truncf %30 : vector<128x128xf32> to vector<128x128xbf16>
    %cst_19 = arith.constant dense<0.000000e+00> : vector<128x128xf32>
    %32 = tpu.matmul %29, %31, %cst_19 {dimension_numbers = #tpu.dot_dimension_numbers<[1], [0], [0], [1], [0, 0, 1, 1], [], []>} : vector<128x128xbf16>, vector<128x128xbf16>, vector<128x128xf32> -> vector<128x128xf32>
    %c1_20 = arith.constant 1 : index
    %c0_21 = arith.constant 0 : index
    %c0_22 = arith.constant 0 : index
    %33 = vector.load %arg1[%c1_20, %c0_21, %c0_22] : memref<2x128x128xf32, #tpu.memory_space<vmem>>, vector<1x128x128xf32>
    %34 = vector.shape_cast %33 : vector<1x128x128xf32> to vector<128x128xf32>
    %35 = arith.truncf %34 : vector<128x128xf32> to vector<128x128xbf16>
    %36 = vector.extract_strided_slice %26 {offsets = [128, 0], sizes = [128, 128], strides = [1, 1]} : vector<256x128xf32> to vector<128x128xf32>
    %37 = arith.truncf %36 : vector<128x128xf32> to vector<128x128xbf16>
    %cst_23 = arith.constant dense<0.000000e+00> : vector<128x128xf32>
    %38 = tpu.matmul %35, %37, %cst_23 {dimension_numbers = #tpu.dot_dimension_numbers<[1], [0], [0], [1], [0, 0, 1, 1], [], []>} : vector<128x128xbf16>, vector<128x128xbf16>, vector<128x128xf32> -> vector<128x128xf32>
    %39 = tpu.concatenate %32, %38 in 0 : vector<128x128xf32>, vector<128x128xf32> -> vector<256x128xf32>
    %c0_24 = arith.constant 0 : index
    %c0_25 = arith.constant 0 : index
    %40 = vector.load %arg6[%c0_24, %c0_25] : memref<1x128xf32, #tpu.memory_space<vmem>>, vector<1x128xf32>
    %41 = vector.broadcast %40 : vector<1x128xf32> to vector<256x128xf32>
    %42 = arith.addf %39, %41 : vector<256x128xf32>
    %cst_26 = arith.constant 0.000000e+00 : f32
    %43 = vector.broadcast %cst_26 : f32 to vector<256x128xf32>
    %44 = arith.maximumf %42, %43 : vector<256x128xf32>
    %45 = arith.truncf %44 : vector<256x128xf32> to vector<256x128xbf16>
    %c0_27 = arith.constant 0 : index
    %c0_28 = arith.constant 0 : index
    %46 = vector.load %arg7[%c0_27, %c0_28] : memref<128x128xf32, #tpu.memory_space<vmem>>, vector<128x128xf32>
    %47 = arith.truncf %46 : vector<128x128xf32> to vector<128x128xbf16>
    %cst_29 = arith.constant dense<0.000000e+00> : vector<256x128xf32>
    %48 = tpu.matmul %45, %47, %cst_29 {dimension_numbers = #tpu.dot_dimension_numbers<[1], [0], [0], [1], [0, 0, 1, 1], [], []>} : vector<256x128xbf16>, vector<128x128xbf16>, vector<256x128xf32> -> vector<256x128xf32>
    %c0_30 = arith.constant 0 : index
    %c0_31 = arith.constant 0 : index
    %49 = vector.load %arg8[%c0_30, %c0_31] : memref<1x128xf32, #tpu.memory_space<vmem>>, vector<1x128xf32>
    %50 = vector.broadcast %49 : vector<1x128xf32> to vector<256x128xf32>
    %51 = arith.addf %48, %50 : vector<256x128xf32>
    %52 = arith.truncf %51 : vector<256x128xf32> to vector<256x128xbf16>
    %c0_32 = arith.constant 0 : index
    %c0_33 = arith.constant 0 : index
    %53 = vector.load %arg9[%c0_32, %c0_33] : memref<256x128xbf16, #tpu.memory_space<vmem>>, vector<256x128xbf16>
    tpu.vector_store %arg9[%c0_32, %c0_33], %52 {strides = array<i32>} : memref<256x128xbf16, #tpu.memory_space<vmem>>, vector<256x128xbf16>,
    return
  }
  func.func @transform_0(%arg0: i32) -> (i32, i32, i32) {
    %c0_i32 = arith.constant 0 : i32
    %c0_i32_0 = arith.constant 0 : i32
    %c0_i32_1 = arith.constant 0 : i32
    return %arg0, %c0_i32, %c0_i32_0 : i32, i32, i32
  }
  func.func @transform_1(%arg0: i32) -> (i32, i32) {
    %c0_i32 = arith.constant 0 : i32
    %c0_i32_0 = arith.constant 0 : i32
    return %arg0, %c0_i32 : i32, i32
  }
  func.func @transform_2(%arg0: i32) -> (i32, i32) {
    %c0_i32 = arith.constant 0 : i32
    %c0_i32_0 = arith.constant 0 : i32
    %c0_i32_1 = arith.constant 0 : i32
    return %c0_i32, %c0_i32_0 : i32, i32
  }
  func.func @transform_3(%arg0: i32) -> (i32, i32) {
    %c0_i32 = arith.constant 0 : i32
    %c0_i32_0 = arith.constant 0 : i32
    %c0_i32_1 = arith.constant 0 : i32
    return %c0_i32, %c0_i32_0 : i32, i32
  }
  func.func @transform_4(%arg0: i32) -> (i32, i32) {
    %c0_i32 = arith.constant 0 : i32
    %c0_i32_0 = arith.constant 0 : i32
    %c0_i32_1 = arith.constant 0 : i32
    return %c0_i32, %c0_i32_0 : i32, i32
  }
  func.func @transform_5(%arg0: i32) -> (i32, i32) {
    %c0_i32 = arith.constant 0 : i32
    %c0_i32_0 = arith.constant 0 : i32
    %c0_i32_1 = arith.constant 0 : i32
    return %c0_i32, %c0_i32_0 : i32, i32
  }
  func.func @transform_6(%arg0: i32) -> (i32, i32) {
    %c0_i32 = arith.constant 0 : i32
    %c0_i32_0 = arith.constant 0 : i32
    %c0_i32_1 = arith.constant 0 : i32
    return %c0_i32, %c0_i32_0 : i32, i32
  }
  func.func @transform_7(%arg0: i32) -> (i32, i32) {
    %c0_i32 = arith.constant 0 : i32
    %c0_i32_0 = arith.constant 0 : i32
    %c0_i32_1 = arith.constant 0 : i32
    return %c0_i32, %c0_i32_0 : i32, i32
  }
  func.func @transform_8(%arg0: i32) -> (i32, i32) {
    %c0_i32 = arith.constant 0 : i32
    %c0_i32_0 = arith.constant 0 : i32
    return %arg0, %c0_i32 : i32, i32
  }
}

</mosaic_0001>

<llo_original>
// kernel: tpu_custom_call.1
$region0: #{tpu_custom_call.1}
  #allocation0 [shape = 'u32[]', space=smem, size = 0x4, offset = 0x4, fixed_abs, tag = 'smem constant byte address 0x4 - core index']
  #allocation1 [shape = 'u32[144,128]{1,0:T(1,128)}', space=vmem, size = 0x12000, scoped, tag = 'internal scratch']
  %s0 = inlined_call_operand.vmem [shape: f32[4,128,128], index: 0, kind: input, shape index: {}]
  %s1 = inlined_call_operand.vmem [shape: f32[512,8], index: 1, kind: input, shape index: {}]
  %s2 = inlined_call_operand.vmem [shape: f32[8,128], index: 2, kind: input, shape index: {}]
  %s3 = inlined_call_operand.vmem [shape: f32[1,128], index: 3, kind: input, shape index: {}]
  %s4 = inlined_call_operand.hbm [shape: f32[128,128], index: 4, kind: input, shape index: {}]
  %s5 = inlined_call_operand.vmem [shape: f32[1,128], index: 5, kind: input, shape index: {}]
  %s6 = inlined_call_operand.hbm [shape: f32[128,128], index: 6, kind: input, shape index: {}]
  %s7 = inlined_call_operand.vmem [shape: f32[1,128], index: 7, kind: input, shape index: {}]
  %s8 = inlined_call_operand.hbm [shape: bf16[512,128], index: 8, kind: output, shape index: {}]
  %s9 = sld [smem:[#allocation0]]
  $region73: #{tpu_custom_call.1} parent=0
    _
  %s11 = ssub.s32 1, %s9
  %s12 = scalar_select 0, %s11, %s9
  $region1: #{tpu_custom_call.1} parent=0
    #allocation2 [shape = 'u8[65536]{0}', space=vmem, size = 0x10000, scoped, tag = 'input window, operand 4, single buffered']
    #allocation3 [shape = 's32[2]{0}', space=sflag, size = 0x8, scoped, tag = 'scoped memory for tpu_custom_call.1']
    #allocation4 [shape = 's32[2]{0}', space=sflag, size = 0x8, scoped, tag = 'scoped memory for tpu_custom_call.1']
    #allocation5 [shape = 'u8[65536]{0}', space=vmem, size = 0x10000, scoped, tag = 'input window, operand 6, single buffered']
    #allocation6 [shape = 's32[1]{0}', space=sflag, size = 0x4, scoped, tag = 'scoped memory for tpu_custom_call.1']
    #allocation7 [shape = 'u8[131072]{0}', space=vmem, size = 0x20000, scoped, tag = 'output window, operand 0']
    %13 = vsyncpa [#allocation3], 0
    %14 = vsyncpa [#allocation6], 0
    %15 = vsyncpa [#allocation4], 0
    %s16 = scalar_lea.sflag [#allocation4], 1
    %17 = vsyncpa %s16, 0
    loop: start=0, step=1, limit=4
    $region2: #{tpu_custom_call.1} parent=1 // loop_pre_header
      _
    $region3: #{tpu_custom_call.1} parent=1 // loop_header
      %s19 = sphi 0, %s23
      %p20 = scmp.ge.s32.totalorder %s19, 4
      %s29 = sphi 0, %s31
      %s32 = sphi 0, %s29
      %s33 = sphi 0, %s32
      %s49 = sphi 0, %s33
      %s55 = sphi 0, %s57
      %s58 = sphi 0, %s55
      %s59 = sphi 0, %s58
      %s75 = sphi 0, %s59
      %s79 = sphi 0, %s79
      %s81 = sphi 0, %s79
      %s82 = sphi 0, %s81
      %s96 = sphi 0, %s82
      %s100 = sphi 0, %s100
      %s102 = sphi 0, %s100
      %s103 = sphi 0, %s102
      %s117 = sphi 0, %s103
      %s121 = sphi 0, %s121
      %s123 = sphi 0, %s121
      %s124 = sphi 0, %s123
      %s138 = sphi 0, %s124
      %s142 = sphi 0, %s142
      %s144 = sphi 0, %s142
      %s145 = sphi 0, %s144
      %s159 = sphi 0, %s145
      %s163 = sphi 0, %s163
      %s165 = sphi 0, %s163
      %s166 = sphi 0, %s165
      %s180 = sphi 0, %s166
      %s184 = sphi 0, %s184
      %s186 = sphi 0, %s184
      %s187 = sphi 0, %s186
      %s201 = sphi 0, %s187
      %s207 = sphi 0, %s209
      %s210 = sphi 0, %s207
      %s211 = sphi 0, %s210
      %s227 = sphi 0, %s211
    $region4: #{tpu_custom_call.1} parent=1 // loop_header_branch
      %22 = sbr.rel (%p20) target = $region8
    $region5: #{tpu_custom_call.1} parent=1 // loop_body
      %s24 = ssub.s32 %s19, 1
      %s25 = ssub.s32 %s19, 2
      %s26 = sadd.s32 %s19, 1
      %s27 = ssub.s32 %s19, %s26
      %p28 = scmp.eq.s32.totalorder %s27, 0
      %s30 = sadd.s32 %s29, 1
      %s31 = scalar_select %p28, %s29, %s30
      %p34 = pneg %p28
      %p35 = scmp.eq.s32.totalorder %s19, 1
      %p36 = por %p34, %p35
      %p37 = scmp.ne.s32.totalorder %s29, %s32
      %p38 = scmp.eq.s32.totalorder %s19, 0
      %p39 = por %p37, %p38
      %p40 = scmp.ne.s32.totalorder %s29, %s32
      %p41 = scmp.eq.s32.totalorder %s24, 1
      %p42 = por %p40, %p41
      %p43 = scmp.ne.s32.totalorder %s32, %s33
      %p44 = scmp.eq.s32.totalorder %s24, 0
      %p45 = por %p43, %p44
      %p46 = scmp.ne.s32.totalorder %s32, %s33
      %p47 = scmp.eq.s32.totalorder %s25, 1
      %p48 = por %p46, %p47
      %p50 = scmp.ne.s32.totalorder %s33, %s49
      %p51 = scmp.eq.s32.totalorder %s25, 0
      %p52 = por %p50, %p51
      %s53 = ssub.s32 %s19, %s26
      %p54 = scmp.eq.s32.totalorder %s53, 0
      %s56 = sadd.s32 %s55, 1
      %s57 = scalar_select %p54, %s55, %s56
      %p60 = pneg %p54
      %p61 = scmp.eq.s32.totalorder %s19, 1
      %p62 = por %p60, %p61
      %p63 = scmp.ne.s32.totalorder %s55, %s58
      %p64 = scmp.eq.s32.totalorder %s19, 0
      %p65 = por %p63, %p64
      %p66 = scmp.ne.s32.totalorder %s55, %s58
      %p67 = scmp.eq.s32.totalorder %s24, 1
      %p68 = por %p66, %p67
      %p69 = scmp.ne.s32.totalorder %s58, %s59
      %p70 = scmp.eq.s32.totalorder %s24, 0
      %p71 = por %p69, %p70
      %p72 = scmp.ne.s32.totalorder %s58, %s59
      %p73 = scmp.eq.s32.totalorder %s25, 1
      %p74 = por %p72, %p73
      %p76 = scmp.ne.s32.totalorder %s59, %s75
      %p77 = scmp.eq.s32.totalorder %s25, 0
      %p78 = por %p76, %p77
      %s80 = sadd.s32 %s79, 1
      %p83 = scmp.eq.s32.totalorder %s19, 1
      %p84 = scmp.ne.s32.totalorder %s79, %s81
      %p85 = scmp.eq.s32.totalorder %s19, 0
      %p86 = por %p84, %p85
      %p87 = scmp.ne.s32.totalorder %s79, %s81
      %p88 = scmp.eq.s32.totalorder %s24, 1
      %p89 = por %p87, %p88
      %p90 = scmp.ne.s32.totalorder %s81, %s82
      %p91 = scmp.eq.s32.totalorder %s24, 0
      %p92 = por %p90, %p91
      %p93 = scmp.ne.s32.totalorder %s81, %s82
      %p94 = scmp.eq.s32.totalorder %s25, 1
      %p95 = por %p93, %p94
      %p97 = scmp.ne.s32.totalorder %s82, %s96
      %p98 = scmp.eq.s32.totalorder %s25, 0
      %p99 = por %p97, %p98
      %s101 = sadd.s32 %s100, 1
      %p104 = scmp.eq.s32.totalorder %s19, 1
      %p105 = scmp.ne.s32.totalorder %s100, %s102
      %p106 = scmp.eq.s32.totalorder %s19, 0
      %p107 = por %p105, %p106
      %p108 = scmp.ne.s32.totalorder %s100, %s102
      %p109 = scmp.eq.s32.totalorder %s24, 1
      %p110 = por %p108, %p109
      %p111 = scmp.ne.s32.totalorder %s102, %s103
      %p112 = scmp.eq.s32.totalorder %s24, 0
      %p113 = por %p111, %p112
      %p114 = scmp.ne.s32.totalorder %s102, %s103
      %p115 = scmp.eq.s32.totalorder %s25, 1
      %p116 = por %p114, %p115
      %p118 = scmp.ne.s32.totalorder %s103, %s117
      %p119 = scmp.eq.s32.totalorder %s25, 0
      %p120 = por %p118, %p119
      %s122 = sadd.s32 %s121, 1
      %p125 = scmp.eq.s32.totalorder %s19, 1
      %p126 = scmp.ne.s32.totalorder %s121, %s123
      %p127 = scmp.eq.s32.totalorder %s19, 0
      %p128 = por %p126, %p127
      %p129 = scmp.ne.s32.totalorder %s121, %s123
      %p130 = scmp.eq.s32.totalorder %s24, 1
      %p131 = por %p129, %p130
      %p132 = scmp.ne.s32.totalorder %s123, %s124
      %p133 = scmp.eq.s32.totalorder %s24, 0
      %p134 = por %p132, %p133
      %p135 = scmp.ne.s32.totalorder %s123, %s124
      %p136 = scmp.eq.s32.totalorder %s25, 1
      %p137 = por %p135, %p136
      %p139 = scmp.ne.s32.totalorder %s124, %s138
      %p140 = scmp.eq.s32.totalorder %s25, 0
      %p141 = por %p139, %p140
      %s143 = sadd.s32 %s142, 1
      %p146 = scmp.eq.s32.totalorder %s19, 1
      %p147 = scmp.ne.s32.totalorder %s142, %s144
      %p148 = scmp.eq.s32.totalorder %s19, 0
      %p149 = por %p147, %p148
      %p150 = scmp.ne.s32.totalorder %s142, %s144
      %p151 = scmp.eq.s32.totalorder %s24, 1
      %p152 = por %p150, %p151
      %p153 = scmp.ne.s32.totalorder %s144, %s145
      %p154 = scmp.eq.s32.totalorder %s24, 0
      %p155 = por %p153, %p154
      %p156 = scmp.ne.s32.totalorder %s144, %s145
      %p157 = scmp.eq.s32.totalorder %s25, 1
      %p158 = por %p156, %p157
      %p160 = scmp.ne.s32.totalorder %s145, %s159
      %p161 = scmp.eq.s32.totalorder %s25, 0
      %p162 = por %p160, %p161
      %s164 = sadd.s32 %s163, 1
      %p167 = scmp.eq.s32.totalorder %s19, 1
      %p168 = scmp.ne.s32.totalorder %s163, %s165
      %p169 = scmp.eq.s32.totalorder %s19, 0
      %p170 = por %p168, %p169
      %p171 = scmp.ne.s32.totalorder %s163, %s165
      %p172 = scmp.eq.s32.totalorder %s24, 1
      %p173 = por %p171, %p172
      %p174 = scmp.ne.s32.totalorder %s165, %s166
      %p175 = scmp.eq.s32.totalorder %s24, 0
      %p176 = por %p174, %p175
      %p177 = scmp.ne.s32.totalorder %s165, %s166
      %p178 = scmp.eq.s32.totalorder %s25, 1
      %p179 = por %p177, %p178
      %p181 = scmp.ne.s32.totalorder %s166, %s180
      %p182 = scmp.eq.s32.totalorder %s25, 0
      %p183 = por %p181, %p182
      %s185 = sadd.s32 %s184, 1
      %p188 = scmp.eq.s32.totalorder %s19, 1
      %p189 = scmp.ne.s32.totalorder %s184, %s186
      %p190 = scmp.eq.s32.totalorder %s19, 0
      %p191 = por %p189, %p190
      %p192 = scmp.ne.s32.totalorder %s184, %s186
      %p193 = scmp.eq.s32.totalorder %s24, 1
      %p194 = por %p192, %p193
      %p195 = scmp.ne.s32.totalorder %s186, %s187
      %p196 = scmp.eq.s32.totalorder %s24, 0
      %p197 = por %p195, %p196
      %p198 = scmp.ne.s32.totalorder %s186, %s187
      %p199 = scmp.eq.s32.totalorder %s25, 1
      %p200 = por %p198, %p199
      %p202 = scmp.ne.s32.totalorder %s187, %s201
      %p203 = scmp.eq.s32.totalorder %s25, 0
      %p204 = por %p202, %p203
      %s205 = ssub.s32 %s19, %s26
      %p206 = scmp.eq.s32.totalorder %s205, 0
      %s208 = sadd.s32 %s207, 1
      %s209 = scalar_select %p206, %s207, %s208
      %p212 = pneg %p206
      %p213 = scmp.eq.s32.totalorder %s19, 1
      %p214 = por %p212, %p213
      %p215 = scmp.ne.s32.totalorder %s207, %s210
      %p216 = scmp.eq.s32.totalorder %s19, 0
      %p217 = por %p215, %p216
      %p218 = scmp.ne.s32.totalorder %s207, %s210
      %p219 = scmp.eq.s32.totalorder %s24, 1
      %p220 = por %p218, %p219
      %p221 = scmp.ne.s32.totalorder %s210, %s211
      %p222 = scmp.eq.s32.totalorder %s24, 0
      %p223 = por %p221, %p222
      %p224 = scmp.ne.s32.totalorder %s210, %s211
      %p225 = scmp.eq.s32.totalorder %s25, 1
      %p226 = por %p224, %p225
      %p228 = scmp.ne.s32.totalorder %s211, %s227
      %p229 = scmp.eq.s32.totalorder %s25, 0
      %p230 = por %p228, %p229
      %p231 = scmp.le.s32.totalorder 1, %s19
      %p232 = scmp.lt.s32.totalorder %s19, 3
      %p233 = pnand %p231, %p232
      %p234 = pneg %p233
      // Predicated region
      $region9: #{tpu_custom_call.1} parent=5 // pred_check
        _
      $region10: #{tpu_custom_call.1} parent=5 // pred_check_branch
        %236 = sbr.rel (%p233) target = $region12
      $region11: #{tpu_custom_call.1} parent=5 // pred_region
        %s237 = ssub.s32 %s19, 1
        // Predicated region
        $region13: #{tpu_custom_call.1} parent=11 // pred_check
          %p238 = pneg %p92
        $region14: #{tpu_custom_call.1} parent=11 // pred_check_branch
          %240 = sbr.rel (%p238) target = $region16
        $region15: #{tpu_custom_call.1} parent=11 // pred_region
          _
        $region16: #{tpu_custom_call.1} parent=11 // pred_fallthru
          _
        // Predicated region
        $region17: #{tpu_custom_call.1} parent=11 // pred_check
          %p241 = pneg %p113
        $region18: #{tpu_custom_call.1} parent=11 // pred_check_branch
          %243 = sbr.rel (%p241) target = $region20
        $region19: #{tpu_custom_call.1} parent=11 // pred_region
          _
        $region20: #{tpu_custom_call.1} parent=11 // pred_fallthru
          _
        // Predicated region
        $region21: #{tpu_custom_call.1} parent=11 // pred_check
          %p244 = pneg %p134
        $region22: #{tpu_custom_call.1} parent=11 // pred_check_branch
          %246 = sbr.rel (%p244) target = $region24
        $region23: #{tpu_custom_call.1} parent=11 // pred_region
          %s248 = ssub.s32 2048, 2048
          %249 = vsyncadd [#allocation3], %s248
          %s250 = sshll.u32 [#allocation2], 4
          %s251 = int_to_ptr.vmem [resolvable:$true] %s250
          %256 = dma.hbm_to_vmem [thread:$0]  %s4, 2048, %s251, [#allocation3], 128, 128, 8
        $region24: #{tpu_custom_call.1} parent=11 // pred_fallthru
          _
        // Predicated region
        $region25: #{tpu_custom_call.1} parent=11 // pred_check
          %p257 = pneg %p155
        $region26: #{tpu_custom_call.1} parent=11 // pred_check_branch
          %259 = sbr.rel (%p257) target = $region28
        $region27: #{tpu_custom_call.1} parent=11 // pred_region
          _
        $region28: #{tpu_custom_call.1} parent=11 // pred_fallthru
          _
        // Predicated region
        $region29: #{tpu_custom_call.1} parent=11 // pred_check
          %p260 = pneg %p176
        $region30: #{tpu_custom_call.1} parent=11 // pred_check_branch
          %262 = sbr.rel (%p260) target = $region32
        $region31: #{tpu_custom_call.1} parent=11 // pred_region
          %s264 = ssub.s32 2048, 2048
          %265 = vsyncadd [#allocation6], %s264
          %s266 = sshll.u32 [#allocation5], 4
          %s267 = int_to_ptr.vmem [resolvable:$true] %s266
          %272 = dma.hbm_to_vmem [thread:$0]  %s6, 2048, %s267, [#allocation6], 128, 128, 8
        $region32: #{tpu_custom_call.1} parent=11 // pred_fallthru
          _
        // Predicated region
        $region33: #{tpu_custom_call.1} parent=11 // pred_check
          %p273 = pneg %p197
        $region34: #{tpu_custom_call.1} parent=11 // pred_check_branch
          %275 = sbr.rel (%p273) target = $region36
        $region35: #{tpu_custom_call.1} parent=11 // pred_region
          _
        $region36: #{tpu_custom_call.1} parent=11 // pred_fallthru
          _
      $region12: #{tpu_custom_call.1} parent=5 // pred_fallthru
        _
      %p276 = scmp.lt.s32.totalorder %s19, 2
      // Predicated region
      $region37: #{tpu_custom_call.1} parent=5 // pred_check
        %p277 = pneg %p276
      $region38: #{tpu_custom_call.1} parent=5 // pred_check_branch
        %279 = sbr.rel (%p277) target = $region40
      $region39: #{tpu_custom_call.1} parent=5 // pred_region
        // Predicated region
        $region41: #{tpu_custom_call.1} parent=39 // pred_check
          %p280 = pneg %p39
        $region42: #{tpu_custom_call.1} parent=39 // pred_check_branch
          %282 = sbr.rel (%p280) target = $region44
        $region43: #{tpu_custom_call.1} parent=39 // pred_region
          %s283 = smul.u32 2, %s19
          %p284 = scmp.lt.s32.totalorder %s283, 3
          %s285 = scalar_select %p284, %s283, 3
          %s286 = smul.addr %s285, 16
          %s287 = smul.addr %s286, 8
          %s288 = scalar_lea.vmem %s0, %s287
          %s289 = smul.u32 2, %s19
        $region44: #{tpu_custom_call.1} parent=39 // pred_fallthru
          _
        // Predicated region
        $region45: #{tpu_custom_call.1} parent=39 // pred_check
          %p290 = pneg %p65
        $region46: #{tpu_custom_call.1} parent=39 // pred_check_branch
          %292 = sbr.rel (%p290) target = $region48
        $region47: #{tpu_custom_call.1} parent=39 // pred_region
          %s293 = smul.u32 32, %s19
          %p294 = scmp.lt.s32.totalorder %s293, 63
          %s295 = scalar_select %p294, %s293, 63
          %s296 = smul.addr %s295, 8
          %s297 = scalar_lea.vmem %s1, %s296
          %s298 = smul.u32 32, %s19
        $region48: #{tpu_custom_call.1} parent=39 // pred_fallthru
          _
      $region40: #{tpu_custom_call.1} parent=5 // pred_fallthru
        _
      %p299 = scmp.le.s32.totalorder 1, %s19
      %p300 = scmp.lt.s32.totalorder %s19, 3
      %p301 = pnand %p299, %p300
      %p302 = pneg %p301
      // Predicated region
      $region49: #{tpu_custom_call.1} parent=5 // pred_check
        _
      $region50: #{tpu_custom_call.1} parent=5 // pred_check_branch
        %304 = sbr.rel (%p301) target = $region52
      $region51: #{tpu_custom_call.1} parent=5 // pred_region
        %s305 = ssub.s32 %s19, 1
        // Predicated region
        $region53: #{tpu_custom_call.1} parent=51 // pred_check
          %p306 = pneg %p134
        $region54: #{tpu_custom_call.1} parent=51 // pred_check_branch
          %308 = sbr.rel (%p306) target = $region56
        $region55: #{tpu_custom_call.1} parent=51 // pred_region
          %309 = dma.done [#allocation3], 2048
        $region56: #{tpu_custom_call.1} parent=51 // pred_fallthru
          _
        // Predicated region
        $region57: #{tpu_custom_call.1} parent=51 // pred_check
          %p310 = pneg %p176
        $region58: #{tpu_custom_call.1} parent=51 // pred_check_branch
          %312 = sbr.rel (%p310) target = $region60
        $region59: #{tpu_custom_call.1} parent=51 // pred_region
          %313 = dma.done [#allocation6], 2048
        $region60: #{tpu_custom_call.1} parent=51 // pred_fallthru
          _
        %s314 = smul.u32 2, %s24
        %p315 = scmp.lt.s32.totalorder %s314, 3
        %s316 = scalar_select %p315, %s314, 3
        %s317 = smul.addr %s316, 16
        %s318 = smul.addr %s317, 8
        %s319 = scalar_lea.vmem %s0, %s318
        %p320 = pneg %p45
        %p321 = pneg %p42
        %s322 = smul.u32 32, %s24
        %p323 = scmp.lt.s32.totalorder %s322, 63
        %s324 = scalar_select %p323, %s322, 63
        %s325 = smul.addr %s324, 8
        %s326 = scalar_lea.vmem %s1, %s325
        %p327 = pneg %p71
        %p328 = pneg %p68
        %p329 = pneg %p92
        %p330 = pneg %p89
        %p331 = pneg %p113
        %p332 = pneg %p110
        %p333 = pneg %p134
        %p334 = pneg %p131
        %p335 = pneg %p155
        %p336 = pneg %p152
        %p337 = pneg %p176
        %p338 = pneg %p173
        %p339 = pneg %p197
        %p340 = pneg %p194
        %p341 = pneg %p223
        %p342 = pneg %p220
        %s343 = sand.u32 %s210, 1
        %s344 = scalar_lea.sflag [#allocation4], %s343
        %s345 = sand.u32 %s210, 1
        %s346 = smul.addr %s345, 128
        %s347 = scalar_lea.vmem [#allocation7], %s346
        %s348 = smul.u32 2, %s24
        %p349 = scmp.lt.s32.totalorder %s348, 3
        %s350 = scalar_select %p349, %s348, 3
        %s351 = smul.addr %s350, 16
        %s352 = smul.addr %s351, 8
        %s353 = scalar_lea.vmem %s0, %s352
        %s354 = smul.u32 2, %s24
        %s355 = smul.u32 32, %s24
        %p356 = scmp.lt.s32.totalorder %s355, 63
        %s357 = scalar_select %p356, %s355, 63
        %s358 = smul.addr %s357, 8
        %s359 = scalar_lea.vmem %s1, %s358
        %s360 = smul.u32 32, %s24
        %s361 = smul.u32 32, %s24
        %v363 = vld [vmem:[%s359] sm:$0xff]
        %v364 = vld [vmem:[%s359 + $0x8] sm:$0xff]
        %v365 = vld [vmem:[%s359 + $0x10] sm:$0xff]
        %v366 = vld [vmem:[%s359 + $0x18] sm:$0xff]
        %v367 = vld [vmem:[%s359 + $0x20] sm:$0xff]
        %v368 = vld [vmem:[%s359 + $0x28] sm:$0xff]
        %v369 = vld [vmem:[%s359 + $0x30] sm:$0xff]
        %v370 = vld [vmem:[%s359 + $0x38] sm:$0xff]
        %v371 = vld [vmem:[%s359 + $0x40] sm:$0xff]
        %v372 = vld [vmem:[%s359 + $0x48] sm:$0xff]
        %v373 = vld [vmem:[%s359 + $0x50] sm:$0xff]
        %v374 = vld [vmem:[%s359 + $0x58] sm:$0xff]
        %v375 = vld [vmem:[%s359 + $0x60] sm:$0xff]
        %v376 = vld [vmem:[%s359 + $0x68] sm:$0xff]
        %v377 = vld [vmem:[%s359 + $0x70] sm:$0xff]
        %v378 = vld [vmem:[%s359 + $0x78] sm:$0xff]
        %v379 = vld [vmem:[%s359 + $0x80] sm:$0xff]
        %v380 = vld [vmem:[%s359 + $0x88] sm:$0xff]
        %v381 = vld [vmem:[%s359 + $0x90] sm:$0xff]
        %v382 = vld [vmem:[%s359 + $0x98] sm:$0xff]
        %v383 = vld [vmem:[%s359 + $0xa0] sm:$0xff]
        %v384 = vld [vmem:[%s359 + $0xa8] sm:$0xff]
        %v385 = vld [vmem:[%s359 + $0xb0] sm:$0xff]
        %v386 = vld [vmem:[%s359 + $0xb8] sm:$0xff]
        %v387 = vld [vmem:[%s359 + $0xc0] sm:$0xff]
        %v388 = vld [vmem:[%s359 + $0xc8] sm:$0xff]
        %v389 = vld [vmem:[%s359 + $0xd0] sm:$0xff]
        %v390 = vld [vmem:[%s359 + $0xd8] sm:$0xff]
        %v391 = vld [vmem:[%s359 + $0xe0] sm:$0xff]
        %v392 = vld [vmem:[%s359 + $0xe8] sm:$0xff]
        %v393 = vld [vmem:[%s359 + $0xf0] sm:$0xff]
        %v394 = vld [vmem:[%s359 + $0xf8] sm:$0xff]
        %v395 = vpack.c.bf16 %v364, %v363
        %v396 = vpack.c.bf16 %v366, %v365
        %v397 = vpack.c.bf16 %v368, %v367
        %v398 = vpack.c.bf16 %v370, %v369
        %v399 = vpack.c.bf16 %v372, %v371
        %v400 = vpack.c.bf16 %v374, %v373
        %v401 = vpack.c.bf16 %v376, %v375
        %v402 = vpack.c.bf16 %v378, %v377
        %v403 = vpack.c.bf16 %v380, %v379
        %v404 = vpack.c.bf16 %v382, %v381
        %v405 = vpack.c.bf16 %v384, %v383
        %v406 = vpack.c.bf16 %v386, %v385
        %v407 = vpack.c.bf16 %v388, %v387
        %v408 = vpack.c.bf16 %v390, %v389
        %v409 = vpack.c.bf16 %v392, %v391
        %v410 = vpack.c.bf16 %v394, %v393
        %v411 = vld [vmem:[%s2] sm:$0xff]
        %v412 = vpack.c.bf16 %v411, %v411
        %vm413 = vcmask 64512
        %v415 = vsel %vm413, %v395, 0
        %v418 = vsel %vm413, %v396, 0
        %v421 = vsel %vm413, %v397, 0
        %v424 = vsel %vm413, %v398, 0
        %v427 = vsel %vm413, %v399, 0
        %v430 = vsel %vm413, %v400, 0
        %v433 = vsel %vm413, %v401, 0
        %v436 = vsel %vm413, %v402, 0
        %v439 = vsel %vm413, %v403, 0
        %v442 = vsel %vm413, %v404, 0
        %v445 = vsel %vm413, %v405, 0
        %v448 = vsel %vm413, %v406, 0
        %v451 = vsel %vm413, %v407, 0
        %v454 = vsel %vm413, %v408, 0
        %v457 = vsel %vm413, %v409, 0
        %v460 = vsel %vm413, %v410, 0
        %vm462 = vcmask 1043456
        %v464 = vsel %vm462, %v412, 0
        %466 = vmatprep.subr.bf16.mxu0 0
        %467 = vmatpush1.bf16.msra.mxu0 %v464
        %468 = vmatprep.subr.bf16.mxu0 0
        %469 = vmatpush1.bf16.msra.mxu0 0
        %470 = vmatprep.subr.bf16.mxu0 0
        %471 = vmatpush1.bf16.msra.mxu0 0
        %472 = vmatprep.subr.bf16.mxu0 0
        %473 = vmatpush1.bf16.msra.mxu0 0
        %474 = vmatprep.subr.bf16.mxu0 0
        %475 = vmatpush1.bf16.msra.mxu0 0
        %476 = vmatprep.subr.bf16.mxu0 0
        %477 = vmatpush1.bf16.msra.mxu0 0
        %478 = vmatprep.subr.bf16.mxu0 0
        %479 = vmatpush1.bf16.msra.mxu0 0
        %480 = vmatprep.subr.bf16.mxu0 0
        %481 = vmatpush1.bf16.msra.mxu0 0
        %482 = vmatprep.subr.bf16.mxu0 0
        %483 = vmatpush1.bf16.msra.mxu0 0
        %484 = vmatprep.subr.bf16.mxu0 0
        %485 = vmatpush1.bf16.msra.mxu0 0
        %486 = vmatprep.subr.bf16.mxu0 0
        %487 = vmatpush1.bf16.msra.mxu0 0
        %488 = vmatprep.subr.bf16.mxu0 0
        %489 = vmatpush1.bf16.msra.mxu0 0
        %490 = vmatprep.subr.bf16.mxu0 0
        %491 = vmatpush1.bf16.msra.mxu0 0
        %492 = vmatprep.subr.bf16.mxu0 0
        %493 = vmatpush1.bf16.msra.mxu0 0
        %494 = vmatprep.subr.bf16.mxu0 0
        %495 = vmatpush1.bf16.msra.mxu0 0
        %496 = vmatprep.subr.bf16.mxu0 0
        %497 = vmatpush1.bf16.msra.mxu0 0
        %498 = vmatprep.mubr.bf16.mxu0 0
        %499 = vmatmul.mubr.bf16.gmra.mrb[0].mxu0 %v415
        %v500 = vpop.f32.mrb[0].mxu0
        %v501 = vadd.f32 0.0, %v500
        %v502 = vpop.f32.mrb[0].mxu0
        %v503 = vpop.f32.mrb[0].mxu0
        %v504 = vadd.f32 0.0, %v503
        %v505 = vpop.f32.mrb[0].mxu0
        %506 = vmatprep.mubr.bf16.mxu0 0
        %507 = vmatmul.mubr.bf16.gmra.mrb[0].mxu0 %v418
        %v508 = vpop.f32.mrb[0].mxu0
        %v509 = vadd.f32 0.0, %v508
        %v510 = vpop.f32.mrb[0].mxu0
        %v511 = vpop.f32.mrb[0].mxu0
        %v512 = vadd.f32 0.0, %v511
        %v513 = vpop.f32.mrb[0].mxu0
        %514 = vmatprep.mubr.bf16.mxu0 0
        %515 = vmatmul.mubr.bf16.gmra.mrb[0].mxu0 %v421
        %v516 = vpop.f32.mrb[0].mxu0
        %v517 = vadd.f32 0.0, %v516
        %v518 = vpop.f32.mrb[0].mxu0
        %v519 = vpop.f32.mrb[0].mxu0
        %v520 = vadd.f32 0.0, %v519
        %v521 = vpop.f32.mrb[0].mxu0
        %522 = vmatprep.mubr.bf16.mxu0 0
        %523 = vmatmul.mubr.bf16.gmra.mrb[0].mxu0 %v424
        %v524 = vpop.f32.mrb[0].mxu0
        %v525 = vadd.f32 0.0, %v524
        %v526 = vpop.f32.mrb[0].mxu0
        %v527 = vpop.f32.mrb[0].mxu0
        %v528 = vadd.f32 0.0, %v527
        %v529 = vpop.f32.mrb[0].mxu0
        %530 = vmatprep.mubr.bf16.mxu0 0
        %531 = vmatmul.mubr.bf16.gmra.mrb[0].mxu0 %v427
        %v532 = vpop.f32.mrb[0].mxu0
        %v533 = vadd.f32 0.0, %v532
        %v534 = vpop.f32.mrb[0].mxu0
        %v535 = vpop.f32.mrb[0].mxu0
        %v536 = vadd.f32 0.0, %v535
        %v537 = vpop.f32.mrb[0].mxu0
        %538 = vmatprep.mubr.bf16.mxu0 0
        %539 = vmatmul.mubr.bf16.gmra.mrb[0].mxu0 %v430
        %v540 = vpop.f32.mrb[0].mxu0
        %v541 = vadd.f32 0.0, %v540
        %v542 = vpop.f32.mrb[0].mxu0
        %v543 = vpop.f32.mrb[0].mxu0
        %v544 = vadd.f32 0.0, %v543
        %v545 = vpop.f32.mrb[0].mxu0
        %546 = vmatprep.mubr.bf16.mxu0 0
        %547 = vmatmul.mubr.bf16.gmra.mrb[0].mxu0 %v433
        %v548 = vpop.f32.mrb[0].mxu0
        %v549 = vadd.f32 0.0, %v548
        %v550 = vpop.f32.mrb[0].mxu0
        %v551 = vpop.f32.mrb[0].mxu0
        %v552 = vadd.f32 0.0, %v551
        %v553 = vpop.f32.mrb[0].mxu0
        %554 = vmatprep.mubr.bf16.mxu0 0
        %555 = vmatmul.mubr.bf16.gmra.mrb[0].mxu0 %v436
        %v556 = vpop.f32.mrb[0].mxu0
        %v557 = vadd.f32 0.0, %v556
        %v558 = vpop.f32.mrb[0].mxu0
        %v559 = vpop.f32.mrb[0].mxu0
        %v560 = vadd.f32 0.0, %v559
        %v561 = vpop.f32.mrb[0].mxu0
        %562 = vmatprep.mubr.bf16.mxu0 0
        %563 = vmatmul.mubr.bf16.gmra.mrb[0].mxu0 %v439
        %v564 = vpop.f32.mrb[0].mxu0
        %v565 = vadd.f32 0.0, %v564
        %v566 = vpop.f32.mrb[0].mxu0
        %v567 = vpop.f32.mrb[0].mxu0
        %v568 = vadd.f32 0.0, %v567
        %v569 = vpop.f32.mrb[0].mxu0
        %570 = vmatprep.mubr.bf16.mxu0 0
        %571 = vmatmul.mubr.bf16.gmra.mrb[0].mxu0 %v442
        %v572 = vpop.f32.mrb[0].mxu0
        %v573 = vadd.f32 0.0, %v572
        %v574 = vpop.f32.mrb[0].mxu0
        %v575 = vpop.f32.mrb[0].mxu0
        %v576 = vadd.f32 0.0, %v575
        %v577 = vpop.f32.mrb[0].mxu0
        %578 = vmatprep.mubr.bf16.mxu0 0
        %579 = vmatmul.mubr.bf16.gmra.mrb[0].mxu0 %v445
        %v580 = vpop.f32.mrb[0].mxu0
        %v581 = vadd.f32 0.0, %v580
        %v582 = vpop.f32.mrb[0].mxu0
        %v583 = vpop.f32.mrb[0].mxu0
        %v584 = vadd.f32 0.0, %v583
        %v585 = vpop.f32.mrb[0].mxu0
        %586 = vmatprep.mubr.bf16.mxu0 0
        %587 = vmatmul.mubr.bf16.gmra.mrb[0].mxu0 %v448
        %v588 = vpop.f32.mrb[0].mxu0
        %v589 = vadd.f32 0.0, %v588
        %v590 = vpop.f32.mrb[0].mxu0
        %v591 = vpop.f32.mrb[0].mxu0
        %v592 = vadd.f32 0.0, %v591
        %v593 = vpop.f32.mrb[0].mxu0
        %594 = vmatprep.mubr.bf16.mxu0 0
        %595 = vmatmul.mubr.bf16.gmra.mrb[0].mxu0 %v451
        %v596 = vpop.f32.mrb[0].mxu0
        %v597 = vadd.f32 0.0, %v596
        %v598 = vpop.f32.mrb[0].mxu0
        %v599 = vpop.f32.mrb[0].mxu0
        %v600 = vadd.f32 0.0, %v599
        %v601 = vpop.f32.mrb[0].mxu0
        %602 = vmatprep.mubr.bf16.mxu0 0
        %603 = vmatmul.mubr.bf16.gmra.mrb[0].mxu0 %v454
        %v604 = vpop.f32.mrb[0].mxu0
        %v605 = vadd.f32 0.0, %v604
        %v606 = vpop.f32.mrb[0].mxu0
        %v607 = vpop.f32.mrb[0].mxu0
        %v608 = vadd.f32 0.0, %v607
        %v609 = vpop.f32.mrb[0].mxu0
        %610 = vmatprep.mubr.bf16.mxu0 0
        %611 = vmatmul.mubr.bf16.gmra.mrb[0].mxu0 %v457
        %v612 = vpop.f32.mrb[0].mxu0
        %v613 = vadd.f32 0.0, %v612
        %v614 = vpop.f32.mrb[0].mxu0
        %v615 = vpop.f32.mrb[0].mxu0
        %v616 = vadd.f32 0.0, %v615
        %v617 = vpop.f32.mrb[0].mxu0
        %618 = vmatprep.mubr.bf16.mxu0 0
        %619 = vmatmul.mubr.bf16.gmra.mrb[0].mxu0 %v460
        %v620 = vpop.f32.mrb[0].mxu0
        %v621 = vadd.f32 0.0, %v620
        %v622 = vpop.f32.mrb[0].mxu0
        %v623 = vpop.f32.mrb[0].mxu0
        %v624 = vadd.f32 0.0, %v623
        %v625 = vpop.f32.mrb[0].mxu0
        %626 = vdwg.mxu0
        %v627 = vld [vmem:[%s353] sm:$0xff]
        %v628 = vld [vmem:[%s353 + $0x8] sm:$0xff]
        %v629 = vld [vmem:[%s353 + $0x10] sm:$0xff]
        %v630 = vld [vmem:[%s353 + $0x18] sm:$0xff]
        %v631 = vld [vmem:[%s353 + $0x20] sm:$0xff]
        %v632 = vld [vmem:[%s353 + $0x28] sm:$0xff]
        %v633 = vld [vmem:[%s353 + $0x30] sm:$0xff]
        %v634 = vld [vmem:[%s353 + $0x38] sm:$0xff]
        %v635 = vld [vmem:[%s353 + $0x40] sm:$0xff]
        %v636 = vld [vmem:[%s353 + $0x48] sm:$0xff]
        %v637 = vld [vmem:[%s353 + $0x50] sm:$0xff]
        %v638 = vld [vmem:[%s353 + $0x58] sm:$0xff]
        %v639 = vld [vmem:[%s353 + $0x60] sm:$0xff]
        %v640 = vld [vmem:[%s353 + $0x68] sm:$0xff]
        %v641 = vld [vmem:[%s353 + $0x70] sm:$0xff]
        %v642 = vld [vmem:[%s353 + $0x78] sm:$0xff]
        %v643 = vpack.c.bf16 %v628, %v627
        %v644 = vpack.c.bf16 %v630, %v629
        %v645 = vpack.c.bf16 %v632, %v631
        %v646 = vpack.c.bf16 %v634, %v633
        %v647 = vpack.c.bf16 %v636, %v635
        %v648 = vpack.c.bf16 %v638, %v637
        %v649 = vpack.c.bf16 %v640, %v639
        %v650 = vpack.c.bf16 %v642, %v641
        %v651 = vpack.c.bf16 %v504, %v501
        %v652 = vpack.c.bf16 %v512, %v509
        %v653 = vpack.c.bf16 %v520, %v517
        %v654 = vpack.c.bf16 %v528, %v525
        %v655 = vpack.c.bf16 %v536, %v533
        %v656 = vpack.c.bf16 %v544, %v541
        %v657 = vpack.c.bf16 %v552, %v549
        %v658 = vpack.c.bf16 %v560, %v557
        %659 = vmatprep.subr.bf16.mxu0 0
        %660 = vmatpush1.bf16.msra.mxu0 %v651
        %661 = vmatprep.subr.bf16.mxu0 0
        %662 = vmatpush1.bf16.msra.mxu0 %v652
        %663 = vmatprep.subr.bf16.mxu0 0
        %664 = vmatpush1.bf16.msra.mxu0 %v653
        %665 = vmatprep.subr.bf16.mxu0 0
        %666 = vmatpush1.bf16.msra.mxu0 %v654
        %667 = vmatprep.subr.bf16.mxu0 0
        %668 = vmatpush1.bf16.msra.mxu0 %v655
        %669 = vmatprep.subr.bf16.mxu0 0
        %670 = vmatpush1.bf16.msra.mxu0 %v656
        %671 = vmatprep.subr.bf16.mxu0 0
        %672 = vmatpush1.bf16.msra.mxu0 %v657
        %673 = vmatprep.subr.bf16.mxu0 0
        %674 = vmatpush1.bf16.msra.mxu0 %v658
        %675 = vmatprep.subr.bf16.mxu0 0
        %676 = vmatpush1.bf16.msra.mxu0 0
        %677 = vmatprep.subr.bf16.mxu0 0
        %678 = vmatpush1.bf16.msra.mxu0 0
        %679 = vmatprep.subr.bf16.mxu0 0
        %680 = vmatpush1.bf16.msra.mxu0 0
        %681 = vmatprep.subr.bf16.mxu0 0
        %682 = vmatpush1.bf16.msra.mxu0 0
        %683 = vmatprep.subr.bf16.mxu0 0
        %684 = vmatpush1.bf16.msra.mxu0 0
        %685 = vmatprep.subr.bf16.mxu0 0
        %686 = vmatpush1.bf16.msra.mxu0 0
        %687 = vmatprep.subr.bf16.mxu0 0
        %688 = vmatpush1.bf16.msra.mxu0 0
        %689 = vmatprep.subr.bf16.mxu0 0
        %690 = vmatpush1.bf16.msra.mxu0 0
        %691 = vmatprep.mubr.bf16.mxu0 0
        %692 = vmatmul.mubr.bf16.gmra.mrb[0].mxu0 %v643
        %v693 = vpop.f32.mrb[0].mxu0
        %v694 = vadd.f32 0.0, %v693
        %v695 = vpop.f32.mrb[0].mxu0
        %v696 = vpop.f32.mrb[0].mxu0
        %v697 = vadd.f32 0.0, %v696
        %v698 = vpop.f32.mrb[0].mxu0
        %699 = vmatprep.mubr.bf16.mxu0 0
        %700 = vmatmul.mubr.bf16.gmra.mrb[0].mxu0 %v644
        %v701 = vpop.f32.mrb[0].mxu0
        %v702 = vadd.f32 0.0, %v701
        %v703 = vpop.f32.mrb[0].mxu0
        %v704 = vpop.f32.mrb[0].mxu0
        %v705 = vadd.f32 0.0, %v704
        %v706 = vpop.f32.mrb[0].mxu0
        %707 = vmatprep.mubr.bf16.mxu0 0
        %708 = vmatmul.mubr.bf16.gmra.mrb[0].mxu0 %v645
        %v709 = vpop.f32.mrb[0].mxu0
        %v710 = vadd.f32 0.0, %v709
        %v711 = vpop.f32.mrb[0].mxu0
        %v712 = vpop.f32.mrb[0].mxu0
        %v713 = vadd.f32 0.0, %v712
        %v714 = vpop.f32.mrb[0].mxu0
        %715 = vmatprep.mubr.bf16.mxu0 0
        %716 = vmatmul.mubr.bf16.gmra.mrb[0].mxu0 %v646
        %v717 = vpop.f32.mrb[0].mxu0
        %v718 = vadd.f32 0.0, %v717
        %v719 = vpop.f32.mrb[0].mxu0
        %v720 = vpop.f32.mrb[0].mxu0
        %v721 = vadd.f32 0.0, %v720
        %v722 = vpop.f32.mrb[0].mxu0
        %723 = vmatprep.mubr.bf16.mxu0 0
        %724 = vmatmul.mubr.bf16.gmra.mrb[0].mxu0 %v647
        %v725 = vpop.f32.mrb[0].mxu0
        %v726 = vadd.f32 0.0, %v725
        %v727 = vpop.f32.mrb[0].mxu0
        %v728 = vpop.f32.mrb[0].mxu0
        %v729 = vadd.f32 0.0, %v728
        %v730 = vpop.f32.mrb[0].mxu0
        %731 = vmatprep.mubr.bf16.mxu0 0
        %732 = vmatmul.mubr.bf16.gmra.mrb[0].mxu0 %v648
        %v733 = vpop.f32.mrb[0].mxu0
        %v734 = vadd.f32 0.0, %v733
        %v735 = vpop.f32.mrb[0].mxu0
        %v736 = vpop.f32.mrb[0].mxu0
        %v737 = vadd.f32 0.0, %v736
        %v738 = vpop.f32.mrb[0].mxu0
        %739 = vmatprep.mubr.bf16.mxu0 0
        %740 = vmatmul.mubr.bf16.gmra.mrb[0].mxu0 %v649
        %v741 = vpop.f32.mrb[0].mxu0
        %v742 = vadd.f32 0.0, %v741
        %v743 = vpop.f32.mrb[0].mxu0
        %v744 = vpop.f32.mrb[0].mxu0
        %v745 = vadd.f32 0.0, %v744
        %v746 = vpop.f32.mrb[0].mxu0
        %747 = vmatprep.mubr.bf16.mxu0 0
        %748 = vmatmul.mubr.bf16.gmra.mrb[0].mxu0 %v650
        %v749 = vpop.f32.mrb[0].mxu0
        %v750 = vadd.f32 0.0, %v749
        %v751 = vpop.f32.mrb[0].mxu0
        %v752 = vpop.f32.mrb[0].mxu0
        %v753 = vadd.f32 0.0, %v752
        %v754 = vpop.f32.mrb[0].mxu0
        %755 = vdwg.mxu0
        %s756 = scalar_lea.vmem %s353, 128
        %v757 = vld [vmem:[%s756] sm:$0xff]
        %v758 = vld [vmem:[%s756 + $0x8] sm:$0xff]
        %v759 = vld [vmem:[%s756 + $0x10] sm:$0xff]
        %v760 = vld [vmem:[%s756 + $0x18] sm:$0xff]
        %v761 = vld [vmem:[%s756 + $0x20] sm:$0xff]
        %v762 = vld [vmem:[%s756 + $0x28] sm:$0xff]
        %v763 = vld [vmem:[%s756 + $0x30] sm:$0xff]
        %v764 = vld [vmem:[%s756 + $0x38] sm:$0xff]
        %v765 = vld [vmem:[%s756 + $0x40] sm:$0xff]
        %v766 = vld [vmem:[%s756 + $0x48] sm:$0xff]
        %v767 = vld [vmem:[%s756 + $0x50] sm:$0xff]
        %v768 = vld [vmem:[%s756 + $0x58] sm:$0xff]
        %v769 = vld [vmem:[%s756 + $0x60] sm:$0xff]
        %v770 = vld [vmem:[%s756 + $0x68] sm:$0xff]
        %v771 = vld [vmem:[%s756 + $0x70] sm:$0xff]
        %v772 = vld [vmem:[%s756 + $0x78] sm:$0xff]
        %v773 = vpack.c.bf16 %v758, %v757
        %v774 = vpack.c.bf16 %v760, %v759
        %v775 = vpack.c.bf16 %v762, %v761
        %v776 = vpack.c.bf16 %v764, %v763
        %v777 = vpack.c.bf16 %v766, %v765
        %v778 = vpack.c.bf16 %v768, %v767
        %v779 = vpack.c.bf16 %v770, %v769
        %v780 = vpack.c.bf16 %v772, %v771
        %v781 = vpack.c.bf16 %v568, %v565
        %v782 = vpack.c.bf16 %v576, %v573
        %v783 = vpack.c.bf16 %v584, %v581
        %v784 = vpack.c.bf16 %v592, %v589
        %v785 = vpack.c.bf16 %v600, %v597
        %v786 = vpack.c.bf16 %v608, %v605
        %v787 = vpack.c.bf16 %v616, %v613
        %v788 = vpack.c.bf16 %v624, %v621
        %789 = vmatprep.subr.bf16.mxu0 0
        %790 = vmatpush1.bf16.msra.mxu0 %v781
        %791 = vmatprep.subr.bf16.mxu0 0
        %792 = vmatpush1.bf16.msra.mxu0 %v782
        %793 = vmatprep.subr.bf16.mxu0 0
        %794 = vmatpush1.bf16.msra.mxu0 %v783
        %795 = vmatprep.subr.bf16.mxu0 0
        %796 = vmatpush1.bf16.msra.mxu0 %v784
        %797 = vmatprep.subr.bf16.mxu0 0
        %798 = vmatpush1.bf16.msra.mxu0 %v785
        %799 = vmatprep.subr.bf16.mxu0 0
        %800 = vmatpush1.bf16.msra.mxu0 %v786
        %801 = vmatprep.subr.bf16.mxu0 0
        %802 = vmatpush1.bf16.msra.mxu0 %v787
        %803 = vmatprep.subr.bf16.mxu0 0
        %804 = vmatpush1.bf16.msra.mxu0 %v788
        %805 = vmatprep.subr.bf16.mxu0 0
        %806 = vmatpush1.bf16.msra.mxu0 0
        %807 = vmatprep.subr.bf16.mxu0 0
        %808 = vmatpush1.bf16.msra.mxu0 0
        %809 = vmatprep.subr.bf16.mxu0 0
        %810 = vmatpush1.bf16.msra.mxu0 0
        %811 = vmatprep.subr.bf16.mxu0 0
        %812 = vmatpush1.bf16.msra.mxu0 0
        %813 = vmatprep.subr.bf16.mxu0 0
        %814 = vmatpush1.bf16.msra.mxu0 0
        %815 = vmatprep.subr.bf16.mxu0 0
        %816 = vmatpush1.bf16.msra.mxu0 0
        %817 = vmatprep.subr.bf16.mxu0 0
        %818 = vmatpush1.bf16.msra.mxu0 0
        %819 = vmatprep.subr.bf16.mxu0 0
        %820 = vmatpush1.bf16.msra.mxu0 0
        %821 = vmatprep.mubr.bf16.mxu0 0
        %822 = vmatmul.mubr.bf16.gmra.mrb[0].mxu0 %v773
        %v823 = vpop.f32.mrb[0].mxu0
        %v824 = vadd.f32 0.0, %v823
        %v825 = vpop.f32.mrb[0].mxu0
        %v826 = vpop.f32.mrb[0].mxu0
        %v827 = vadd.f32 0.0, %v826
        %v828 = vpop.f32.mrb[0].mxu0
        %829 = vmatprep.mubr.bf16.mxu0 0
        %830 = vmatmul.mubr.bf16.gmra.mrb[0].mxu0 %v774
        %v831 = vpop.f32.mrb[0].mxu0
        %v832 = vadd.f32 0.0, %v831
        %v833 = vpop.f32.mrb[0].mxu0
        %v834 = vpop.f32.mrb[0].mxu0
        %v835 = vadd.f32 0.0, %v834
        %v836 = vpop.f32.mrb[0].mxu0
        %837 = vmatprep.mubr.bf16.mxu0 0
        %838 = vmatmul.mubr.bf16.gmra.mrb[0].mxu0 %v775
        %v839 = vpop.f32.mrb[0].mxu0
        %v840 = vadd.f32 0.0, %v839
        %v841 = vpop.f32.mrb[0].mxu0
        %v842 = vpop.f32.mrb[0].mxu0
        %v843 = vadd.f32 0.0, %v842
        %v844 = vpop.f32.mrb[0].mxu0
        %845 = vmatprep.mubr.bf16.mxu0 0
        %846 = vmatmul.mubr.bf16.gmra.mrb[0].mxu0 %v776
        %v847 = vpop.f32.mrb[0].mxu0
        %v848 = vadd.f32 0.0, %v847
        %v849 = vpop.f32.mrb[0].mxu0
        %v850 = vpop.f32.mrb[0].mxu0
        %v851 = vadd.f32 0.0, %v850
        %v852 = vpop.f32.mrb[0].mxu0
        %853 = vmatprep.mubr.bf16.mxu0 0
        %854 = vmatmul.mubr.bf16.gmra.mrb[0].mxu0 %v777
        %v855 = vpop.f32.mrb[0].mxu0
        %v856 = vadd.f32 0.0, %v855
        %v857 = vpop.f32.mrb[0].mxu0
        %v858 = vpop.f32.mrb[0].mxu0
        %v859 = vadd.f32 0.0, %v858
        %v860 = vpop.f32.mrb[0].mxu0
        %861 = vmatprep.mubr.bf16.mxu0 0
        %862 = vmatmul.mubr.bf16.gmra.mrb[0].mxu0 %v778
        %v863 = vpop.f32.mrb[0].mxu0
        %v864 = vadd.f32 0.0, %v863
        %v865 = vpop.f32.mrb[0].mxu0
        %v866 = vpop.f32.mrb[0].mxu0
        %v867 = vadd.f32 0.0, %v866
        %v868 = vpop.f32.mrb[0].mxu0
        %869 = vmatprep.mubr.bf16.mxu0 0
        %870 = vmatmul.mubr.bf16.gmra.mrb[0].mxu0 %v779
        %v871 = vpop.f32.mrb[0].mxu0
        %v872 = vadd.f32 0.0, %v871
        %v873 = vpop.f32.mrb[0].mxu0
        %v874 = vpop.f32.mrb[0].mxu0
        %v875 = vadd.f32 0.0, %v874
        %v876 = vpop.f32.mrb[0].mxu0
        %877 = vmatprep.mubr.bf16.mxu0 0
        %878 = vmatmul.mubr.bf16.gmra.mrb[0].mxu0 %v780
        %v879 = vpop.f32.mrb[0].mxu0
        %v880 = vadd.f32 0.0, %v879
        %v881 = vpop.f32.mrb[0].mxu0
        %v882 = vpop.f32.mrb[0].mxu0
        %v883 = vadd.f32 0.0, %v882
        %v884 = vpop.f32.mrb[0].mxu0
        %885 = vdwg.mxu0
        %v886 = vld [vmem:[%s3] sm:$0x1]
        %v888 = vlaneseq
        %v889 = vshrl.u32 %v888, 7
        %v890 = vsub.s32 0, %v889
        %v891 = vrot.slane %v886, %v890
        %v893 = vadd.f32 %v694, %v891
        %v894 = vadd.f32 %v697, %v891
        %v895 = vadd.f32 %v702, %v891
        %v896 = vadd.f32 %v705, %v891
        %v897 = vadd.f32 %v710, %v891
        %v898 = vadd.f32 %v713, %v891
        %v899 = vadd.f32 %v718, %v891
        %v900 = vadd.f32 %v721, %v891
        %v901 = vadd.f32 %v726, %v891
        %v902 = vadd.f32 %v729, %v891
        %v903 = vadd.f32 %v734, %v891
        %v904 = vadd.f32 %v737, %v891
        %v905 = vadd.f32 %v742, %v891
        %v906 = vadd.f32 %v745, %v891
        %v907 = vadd.f32 %v750, %v891
        %v908 = vadd.f32 %v753, %v891
        %v909 = vadd.f32 %v824, %v891
        %v910 = vadd.f32 %v827, %v891
        %v911 = vadd.f32 %v832, %v891
        %v912 = vadd.f32 %v835, %v891
        %v913 = vadd.f32 %v840, %v891
        %v914 = vadd.f32 %v843, %v891
        %v915 = vadd.f32 %v848, %v891
        %v916 = vadd.f32 %v851, %v891
        %v917 = vadd.f32 %v856, %v891
        %v918 = vadd.f32 %v859, %v891
        %v919 = vadd.f32 %v864, %v891
        %v920 = vadd.f32 %v867, %v891
        %v921 = vadd.f32 %v872, %v891
        %v922 = vadd.f32 %v875, %v891
        %v923 = vadd.f32 %v880, %v891
        %v924 = vadd.f32 %v883, %v891
        %v925 = vmax.f32 %v893, 0.0
        %v926 = vmax.f32 %v894, 0.0
        %v927 = vmax.f32 %v895, 0.0
        %v928 = vmax.f32 %v896, 0.0
        %v929 = vmax.f32 %v897, 0.0
        %v930 = vmax.f32 %v898, 0.0
        %v931 = vmax.f32 %v899, 0.0
        %v932 = vmax.f32 %v900, 0.0
        %v933 = vmax.f32 %v901, 0.0
        %v934 = vmax.f32 %v902, 0.0
        %v935 = vmax.f32 %v903, 0.0
        %v936 = vmax.f32 %v904, 0.0
        %v937 = vmax.f32 %v905, 0.0
        %v938 = vmax.f32 %v906, 0.0
        %v939 = vmax.f32 %v907, 0.0
        %v940 = vmax.f32 %v908, 0.0
        %v941 = vmax.f32 %v909, 0.0
        %v942 = vmax.f32 %v910, 0.0
        %v943 = vmax.f32 %v911, 0.0
        %v944 = vmax.f32 %v912, 0.0
        %v945 = vmax.f32 %v913, 0.0
        %v946 = vmax.f32 %v914, 0.0
        %v947 = vmax.f32 %v915, 0.0
        %v948 = vmax.f32 %v916, 0.0
        %v949 = vmax.f32 %v917, 0.0
        %v950 = vmax.f32 %v918, 0.0
        %v951 = vmax.f32 %v919, 0.0
        %v952 = vmax.f32 %v920, 0.0
        %v953 = vmax.f32 %v921, 0.0
        %v954 = vmax.f32 %v922, 0.0
        %v955 = vmax.f32 %v923, 0.0
        %v956 = vmax.f32 %v924, 0.0
        %v957 = vpack.c.bf16 %v926, %v925
        %v958 = vpack.c.bf16 %v928, %v927
        %v959 = vpack.c.bf16 %v930, %v929
        %v960 = vpack.c.bf16 %v932, %v931
        %v961 = vpack.c.bf16 %v934, %v933
        %v962 = vpack.c.bf16 %v936, %v935
        %v963 = vpack.c.bf16 %v938, %v937
        %v964 = vpack.c.bf16 %v940, %v939
        %v965 = vpack.c.bf16 %v942, %v941
        %v966 = vpack.c.bf16 %v944, %v943
        %v967 = vpack.c.bf16 %v946, %v945
        %v968 = vpack.c.bf16 %v948, %v947
        %v969 = vpack.c.bf16 %v950, %v949
        %v970 = vpack.c.bf16 %v952, %v951
        %v971 = vpack.c.bf16 %v954, %v953
        %v972 = vpack.c.bf16 %v956, %v955
        %v973 = vld [vmem:[#allocation2] sm:$0xff]
        %v974 = vld [vmem:[#allocation2 + $0x8] sm:$0xff]
        %v975 = vld [vmem:[#allocation2 + $0x10] sm:$0xff]
        %v976 = vld [vmem:[#allocation2 + $0x18] sm:$0xff]
        %v977 = vld [vmem:[#allocation2 + $0x20] sm:$0xff]
        %v978 = vld [vmem:[#allocation2 + $0x28] sm:$0xff]
        %v979 = vld [vmem:[#allocation2 + $0x30] sm:$0xff]
        %v980 = vld [vmem:[#allocation2 + $0x38] sm:$0xff]
        %v981 = vld [vmem:[#allocation2 + $0x40] sm:$0xff]
        %v982 = vld [vmem:[#allocation2 + $0x48] sm:$0xff]
        %v983 = vld [vmem:[#allocation2 + $0x50] sm:$0xff]
        %v984 = vld [vmem:[#allocation2 + $0x58] sm:$0xff]
        %v985 = vld [vmem:[#allocation2 + $0x60] sm:$0xff]
        %v986 = vld [vmem:[#allocation2 + $0x68] sm:$0xff]
        %v987 = vld [vmem:[#allocation2 + $0x70] sm:$0xff]
        %v988 = vld [vmem:[#allocation2 + $0x78] sm:$0xff]
        %v989 = vpack.c.bf16 %v974, %v973
        %v990 = vpack.c.bf16 %v976, %v975
        %v991 = vpack.c.bf16 %v978, %v977
        %v992 = vpack.c.bf16 %v980, %v979
        %v993 = vpack.c.bf16 %v982, %v981
        %v994 = vpack.c.bf16 %v984, %v983
        %v995 = vpack.c.bf16 %v986, %v985
        %v996 = vpack.c.bf16 %v988, %v987
        %997 = vmatprep.subr.bf16.mxu0 0
        %998 = vmatpush1.bf16.msra.mxu0 %v989
        %999 = vmatprep.subr.bf16.mxu0 0
        %1000 = vmatpush1.bf16.msra.mxu0 %v990
        %1001 = vmatprep.subr.bf16.mxu0 0
        %1002 = vmatpush1.bf16.msra.mxu0 %v991
        %1003 = vmatprep.subr.bf16.mxu0 0
        %1004 = vmatpush1.bf16.msra.mxu0 %v992
        %1005 = vmatprep.subr.bf16.mxu0 0
        %1006 = vmatpush1.bf16.msra.mxu0 %v993
        %1007 = vmatprep.subr.bf16.mxu0 0
        %1008 = vmatpush1.bf16.msra.mxu0 %v994
        %1009 = vmatprep.subr.bf16.mxu0 0
        %1010 = vmatpush1.bf16.msra.mxu0 %v995
        %1011 = vmatprep.subr.bf16.mxu0 0
        %1012 = vmatpush1.bf16.msra.mxu0 %v996
        %1013 = vmatprep.subr.bf16.mxu0 0
        %1014 = vmatpush1.bf16.msra.mxu0 0
        %1015 = vmatprep.subr.bf16.mxu0 0
        %1016 = vmatpush1.bf16.msra.mxu0 0
        %1017 = vmatprep.subr.bf16.mxu0 0
        %1018 = vmatpush1.bf16.msra.mxu0 0
        %1019 = vmatprep.subr.bf16.mxu0 0
        %1020 = vmatpush1.bf16.msra.mxu0 0
        %1021 = vmatprep.subr.bf16.mxu0 0
        %1022 = vmatpush1.bf16.msra.mxu0 0
        %1023 = vmatprep.subr.bf16.mxu0 0
        %1024 = vmatpush1.bf16.msra.mxu0 0
        %1025 = vmatprep.subr.bf16.mxu0 0
        %1026 = vmatpush1.bf16.msra.mxu0 0
        %1027 = vmatprep.subr.bf16.mxu0 0
        %1028 = vmatpush1.bf16.msra.mxu0 0
        %1029 = vmatprep.mubr.bf16.mxu0 0
        %1030 = vmatmul.mubr.bf16.gmra.mrb[0].mxu0 %v957
        %v1031 = vpop.f32.mrb[0].mxu0
        %v1032 = vadd.f32 0.0, %v1031
        %v1033 = vpop.f32.mrb[0].mxu0
        %v1034 = vpop.f32.mrb[0].mxu0
        %v1035 = vadd.f32 0.0, %v1034
        %v1036 = vpop.f32.mrb[0].mxu0
        %1037 = vmatprep.mubr.bf16.mxu0 0
        %1038 = vmatmul.mubr.bf16.gmra.mrb[0].mxu0 %v958
        %v1039 = vpop.f32.mrb[0].mxu0
        %v1040 = vadd.f32 0.0, %v1039
        %v1041 = vpop.f32.mrb[0].mxu0
        %v1042 = vpop.f32.mrb[0].mxu0
        %v1043 = vadd.f32 0.0, %v1042
        %v1044 = vpop.f32.mrb[0].mxu0
        %1045 = vmatprep.mubr.bf16.mxu0 0
        %1046 = vmatmul.mubr.bf16.gmra.mrb[0].mxu0 %v959
        %v1047 = vpop.f32.mrb[0].mxu0
        %v1048 = vadd.f32 0.0, %v1047
        %v1049 = vpop.f32.mrb[0].mxu0
        %v1050 = vpop.f32.mrb[0].mxu0
        %v1051 = vadd.f32 0.0, %v1050
        %v1052 = vpop.f32.mrb[0].mxu0
        %1053 = vmatprep.mubr.bf16.mxu0 0
        %1054 = vmatmul.mubr.bf16.gmra.mrb[0].mxu0 %v960
        %v1055 = vpop.f32.mrb[0].mxu0
        %v1056 = vadd.f32 0.0, %v1055
        %v1057 = vpop.f32.mrb[0].mxu0
        %v1058 = vpop.f32.mrb[0].mxu0
        %v1059 = vadd.f32 0.0, %v1058
        %v1060 = vpop.f32.mrb[0].mxu0
        %1061 = vmatprep.mubr.bf16.mxu0 0
        %1062 = vmatmul.mubr.bf16.gmra.mrb[0].mxu0 %v961
        %v1063 = vpop.f32.mrb[0].mxu0
        %v1064 = vadd.f32 0.0, %v1063
        %v1065 = vpop.f32.mrb[0].mxu0
        %v1066 = vpop.f32.mrb[0].mxu0
        %v1067 = vadd.f32 0.0, %v1066
        %v1068 = vpop.f32.mrb[0].mxu0
        %1069 = vmatprep.mubr.bf16.mxu0 0
        %1070 = vmatmul.mubr.bf16.gmra.mrb[0].mxu0 %v962
        %v1071 = vpop.f32.mrb[0].mxu0
        %v1072 = vadd.f32 0.0, %v1071
        %v1073 = vpop.f32.mrb[0].mxu0
        %v1074 = vpop.f32.mrb[0].mxu0
        %v1075 = vadd.f32 0.0, %v1074
        %v1076 = vpop.f32.mrb[0].mxu0
        %1077 = vmatprep.mubr.bf16.mxu0 0
        %1078 = vmatmul.mubr.bf16.gmra.mrb[0].mxu0 %v963
        %v1079 = vpop.f32.mrb[0].mxu0
        %v1080 = vadd.f32 0.0, %v1079
        %v1081 = vpop.f32.mrb[0].mxu0
        %v1082 = vpop.f32.mrb[0].mxu0
        %v1083 = vadd.f32 0.0, %v1082
        %v1084 = vpop.f32.mrb[0].mxu0
        %1085 = vmatprep.mubr.bf16.mxu0 0
        %1086 = vmatmul.mubr.bf16.gmra.mrb[0].mxu0 %v964
        %v1087 = vpop.f32.mrb[0].mxu0
        %v1088 = vadd.f32 0.0, %v1087
        %v1089 = vpop.f32.mrb[0].mxu0
        %v1090 = vpop.f32.mrb[0].mxu0
        %v1091 = vadd.f32 0.0, %v1090
        %v1092 = vpop.f32.mrb[0].mxu0
        %1093 = vmatprep.mubr.bf16.mxu0 0
        %1094 = vmatmul.mubr.bf16.gmra.mrb[0].mxu0 %v965
        %v1095 = vpop.f32.mrb[0].mxu0
        %v1096 = vadd.f32 0.0, %v1095
        %v1097 = vpop.f32.mrb[0].mxu0
        %v1098 = vpop.f32.mrb[0].mxu0
        %v1099 = vadd.f32 0.0, %v1098
        %v1100 = vpop.f32.mrb[0].mxu0
        %1101 = vmatprep.mubr.bf16.mxu0 0
        %1102 = vmatmul.mubr.bf16.gmra.mrb[0].mxu0 %v966
        %v1103 = vpop.f32.mrb[0].mxu0
        %v1104 = vadd.f32 0.0, %v1103
        %v1105 = vpop.f32.mrb[0].mxu0
        %v1106 = vpop.f32.mrb[0].mxu0
        %v1107 = vadd.f32 0.0, %v1106
        %v1108 = vpop.f32.mrb[0].mxu0
        %1109 = vmatprep.mubr.bf16.mxu0 0
        %1110 = vmatmul.mubr.bf16.gmra.mrb[0].mxu0 %v967
        %v1111 = vpop.f32.mrb[0].mxu0
        %v1112 = vadd.f32 0.0, %v1111
        %v1113 = vpop.f32.mrb[0].mxu0
        %v1114 = vpop.f32.mrb[0].mxu0
        %v1115 = vadd.f32 0.0, %v1114
        %v1116 = vpop.f32.mrb[0].mxu0
        %1117 = vmatprep.mubr.bf16.mxu0 0
        %1118 = vmatmul.mubr.bf16.gmra.mrb[0].mxu0 %v968
        %v1119 = vpop.f32.mrb[0].mxu0
        %v1120 = vadd.f32 0.0, %v1119
        %v1121 = vpop.f32.mrb[0].mxu0
        %v1122 = vpop.f32.mrb[0].mxu0
        %v1123 = vadd.f32 0.0, %v1122
        %v1124 = vpop.f32.mrb[0].mxu0
        %1125 = vmatprep.mubr.bf16.mxu0 0
        %1126 = vmatmul.mubr.bf16.gmra.mrb[0].mxu0 %v969
        %v1127 = vpop.f32.mrb[0].mxu0
        %v1128 = vadd.f32 0.0, %v1127
        %v1129 = vpop.f32.mrb[0].mxu0
        %v1130 = vpop.f32.mrb[0].mxu0
        %v1131 = vadd.f32 0.0, %v1130
        %v1132 = vpop.f32.mrb[0].mxu0
        %1133 = vmatprep.mubr.bf16.mxu0 0
        %1134 = vmatmul.mubr.bf16.gmra.mrb[0].mxu0 %v970
        %v1135 = vpop.f32.mrb[0].mxu0
        %v1136 = vadd.f32 0.0, %v1135
        %v1137 = vpop.f32.mrb[0].mxu0
        %v1138 = vpop.f32.mrb[0].mxu0
        %v1139 = vadd.f32 0.0, %v1138
        %v1140 = vpop.f32.mrb[0].mxu0
        %1141 = vmatprep.mubr.bf16.mxu0 0
        %1142 = vmatmul.mubr.bf16.gmra.mrb[0].mxu0 %v971
        %v1143 = vpop.f32.mrb[0].mxu0
        %v1144 = vadd.f32 0.0, %v1143
        %v1145 = vpop.f32.mrb[0].mxu0
        %v1146 = vpop.f32.mrb[0].mxu0
        %v1147 = vadd.f32 0.0, %v1146
        %v1148 = vpop.f32.mrb[0].mxu0
        %1149 = vmatprep.mubr.bf16.mxu0 0
        %1150 = vmatmul.mubr.bf16.gmra.mrb[0].mxu0 %v972
        %v1151 = vpop.f32.mrb[0].mxu0
        %v1152 = vadd.f32 0.0, %v1151
        %v1153 = vpop.f32.mrb[0].mxu0
        %v1154 = vpop.f32.mrb[0].mxu0
        %v1155 = vadd.f32 0.0, %v1154
        %v1156 = vpop.f32.mrb[0].mxu0
        %1157 = vdwg.mxu0
        %v1158 = vpack.c.bf16 %v1035, %v1032
        %v1159 = vpack.c.bf16 %v1043, %v1040
        %v1160 = vpack.c.bf16 %v1051, %v1048
        %v1161 = vpack.c.bf16 %v1059, %v1056
        %v1162 = vpack.c.bf16 %v1067, %v1064
        %v1163 = vpack.c.bf16 %v1075, %v1072
        %v1164 = vpack.c.bf16 %v1083, %v1080
        %v1165 = vpack.c.bf16 %v1091, %v1088
        %1166 = vmatprep.subr.bf16.mxu0 0
        %1167 = vmatpush1.bf16.msra.mxu0 %v1158
        %1168 = vmatprep.subr.bf16.mxu0 0
        %1169 = vmatpush1.bf16.msra.mxu0 %v1159
        %1170 = vmatprep.subr.bf16.mxu0 0
        %1171 = vmatpush1.bf16.msra.mxu0 %v1160
        %1172 = vmatprep.subr.bf16.mxu0 0
        %1173 = vmatpush1.bf16.msra.mxu0 %v1161
        %1174 = vmatprep.subr.bf16.mxu0 0
        %1175 = vmatpush1.bf16.msra.mxu0 %v1162
        %1176 = vmatprep.subr.bf16.mxu0 0
        %1177 = vmatpush1.bf16.msra.mxu0 %v1163
        %1178 = vmatprep.subr.bf16.mxu0 0
        %1179 = vmatpush1.bf16.msra.mxu0 %v1164
        %1180 = vmatprep.subr.bf16.mxu0 0
        %1181 = vmatpush1.bf16.msra.mxu0 %v1165
        %1182 = vmatprep.subr.bf16.mxu0 0
        %1183 = vmatpush1.bf16.msra.mxu0 0
        %1184 = vmatprep.subr.bf16.mxu0 0
        %1185 = vmatpush1.bf16.msra.mxu0 0
        %1186 = vmatprep.subr.bf16.mxu0 0
        %1187 = vmatpush1.bf16.msra.mxu0 0
        %1188 = vmatprep.subr.bf16.mxu0 0
        %1189 = vmatpush1.bf16.msra.mxu0 0
        %1190 = vmatprep.subr.bf16.mxu0 0
        %1191 = vmatpush1.bf16.msra.mxu0 0
        %1192 = vmatprep.subr.bf16.mxu0 0
        %1193 = vmatpush1.bf16.msra.mxu0 0
        %1194 = vmatprep.subr.bf16.mxu0 0
        %1195 = vmatpush1.bf16.msra.mxu0 0
        %1196 = vmatprep.subr.bf16.mxu0 0
        %1197 = vmatpush1.bf16.msra.mxu0 0
        %1198 = vmatprep.mubr.bf16.mxu0 0
        %1199 = vmatmul.mubr.bf16.gmra.mrb[0].mxu0 %v643
        %v1200 = vpop.f32.mrb[0].mxu0
        %v1201 = vadd.f32 0.0, %v1200
        %v1202 = vpop.f32.mrb[0].mxu0
        %v1203 = vpop.f32.mrb[0].mxu0
        %v1204 = vadd.f32 0.0, %v1203
        %v1205 = vpop.f32.mrb[0].mxu0
        %1206 = vmatprep.mubr.bf16.mxu0 0
        %1207 = vmatmul.mubr.bf16.gmra.mrb[0].mxu0 %v644
        %v1208 = vpop.f32.mrb[0].mxu0
        %v1209 = vadd.f32 0.0, %v1208
        %v1210 = vpop.f32.mrb[0].mxu0
        %v1211 = vpop.f32.mrb[0].mxu0
        %v1212 = vadd.f32 0.0, %v1211
        %v1213 = vpop.f32.mrb[0].mxu0
        %1214 = vmatprep.mubr.bf16.mxu0 0
        %1215 = vmatmul.mubr.bf16.gmra.mrb[0].mxu0 %v645
        %v1216 = vpop.f32.mrb[0].mxu0
        %v1217 = vadd.f32 0.0, %v1216
        %v1218 = vpop.f32.mrb[0].mxu0
        %v1219 = vpop.f32.mrb[0].mxu0
        %v1220 = vadd.f32 0.0, %v1219
        %v1221 = vpop.f32.mrb[0].mxu0
        %1222 = vmatprep.mubr.bf16.mxu0 0
        %1223 = vmatmul.mubr.bf16.gmra.mrb[0].mxu0 %v646
        %v1224 = vpop.f32.mrb[0].mxu0
        %v1225 = vadd.f32 0.0, %v1224
        %v1226 = vpop.f32.mrb[0].mxu0
        %v1227 = vpop.f32.mrb[0].mxu0
        %v1228 = vadd.f32 0.0, %v1227
        %v1229 = vpop.f32.mrb[0].mxu0
        %1230 = vmatprep.mubr.bf16.mxu0 0
        %1231 = vmatmul.mubr.bf16.gmra.mrb[0].mxu0 %v647
        %v1232 = vpop.f32.mrb[0].mxu0
        %v1233 = vadd.f32 0.0, %v1232
        %v1234 = vpop.f32.mrb[0].mxu0
        %v1235 = vpop.f32.mrb[0].mxu0
        %v1236 = vadd.f32 0.0, %v1235
        %v1237 = vpop.f32.mrb[0].mxu0
        %1238 = vmatprep.mubr.bf16.mxu0 0
        %1239 = vmatmul.mubr.bf16.gmra.mrb[0].mxu0 %v648
        %v1240 = vpop.f32.mrb[0].mxu0
        %v1241 = vadd.f32 0.0, %v1240
        %v1242 = vpop.f32.mrb[0].mxu0
        %v1243 = vpop.f32.mrb[0].mxu0
        %v1244 = vadd.f32 0.0, %v1243
        %v1245 = vpop.f32.mrb[0].mxu0
        %1246 = vmatprep.mubr.bf16.mxu0 0
        %1247 = vmatmul.mubr.bf16.gmra.mrb[0].mxu0 %v649
        %v1248 = vpop.f32.mrb[0].mxu0
        %v1249 = vadd.f32 0.0, %v1248
        %v1250 = vpop.f32.mrb[0].mxu0
        %v1251 = vpop.f32.mrb[0].mxu0
        %v1252 = vadd.f32 0.0, %v1251
        %v1253 = vpop.f32.mrb[0].mxu0
        %1254 = vmatprep.mubr.bf16.mxu0 0
        %1255 = vmatmul.mubr.bf16.gmra.mrb[0].mxu0 %v650
        %v1256 = vpop.f32.mrb[0].mxu0
        %v1257 = vadd.f32 0.0, %v1256
        %v1258 = vpop.f32.mrb[0].mxu0
        %v1259 = vpop.f32.mrb[0].mxu0
        %v1260 = vadd.f32 0.0, %v1259
        %v1261 = vpop.f32.mrb[0].mxu0
        %1262 = vdwg.mxu0
        %v1263 = vpack.c.bf16 %v1099, %v1096
        %v1264 = vpack.c.bf16 %v1107, %v1104
        %v1265 = vpack.c.bf16 %v1115, %v1112
        %v1266 = vpack.c.bf16 %v1123, %v1120
        %v1267 = vpack.c.bf16 %v1131, %v1128
        %v1268 = vpack.c.bf16 %v1139, %v1136
        %v1269 = vpack.c.bf16 %v1147, %v1144
        %v1270 = vpack.c.bf16 %v1155, %v1152
        %1271 = vmatprep.subr.bf16.mxu0 0
        %1272 = vmatpush1.bf16.msra.mxu0 %v1263
        %1273 = vmatprep.subr.bf16.mxu0 0
        %1274 = vmatpush1.bf16.msra.mxu0 %v1264
        %1275 = vmatprep.subr.bf16.mxu0 0
        %1276 = vmatpush1.bf16.msra.mxu0 %v1265
        %1277 = vmatprep.subr.bf16.mxu0 0
        %1278 = vmatpush1.bf16.msra.mxu0 %v1266
        %1279 = vmatprep.subr.bf16.mxu0 0
        %1280 = vmatpush1.bf16.msra.mxu0 %v1267
        %1281 = vmatprep.subr.bf16.mxu0 0
        %1282 = vmatpush1.bf16.msra.mxu0 %v1268
        %1283 = vmatprep.subr.bf16.mxu0 0
        %1284 = vmatpush1.bf16.msra.mxu0 %v1269
        %1285 = vmatprep.subr.bf16.mxu0 0
        %1286 = vmatpush1.bf16.msra.mxu0 %v1270
        %1287 = vmatprep.subr.bf16.mxu0 0
        %1288 = vmatpush1.bf16.msra.mxu0 0
        %1289 = vmatprep.subr.bf16.mxu0 0
        %1290 = vmatpush1.bf16.msra.mxu0 0
        %1291 = vmatprep.subr.bf16.mxu0 0
        %1292 = vmatpush1.bf16.msra.mxu0 0
        %1293 = vmatprep.subr.bf16.mxu0 0
        %1294 = vmatpush1.bf16.msra.mxu0 0
        %1295 = vmatprep.subr.bf16.mxu0 0
        %1296 = vmatpush1.bf16.msra.mxu0 0
        %1297 = vmatprep.subr.bf16.mxu0 0
        %1298 = vmatpush1.bf16.msra.mxu0 0
        %1299 = vmatprep.subr.bf16.mxu0 0
        %1300 = vmatpush1.bf16.msra.mxu0 0
        %1301 = vmatprep.subr.bf16.mxu0 0
        %1302 = vmatpush1.bf16.msra.mxu0 0
        %1303 = vmatprep.mubr.bf16.mxu0 0
        %1304 = vmatmul.mubr.bf16.gmra.mrb[0].mxu0 %v773
        %v1305 = vpop.f32.mrb[0].mxu0
        %v1306 = vadd.f32 0.0, %v1305
        %v1307 = vpop.f32.mrb[0].mxu0
        %v1308 = vpop.f32.mrb[0].mxu0
        %v1309 = vadd.f32 0.0, %v1308
        %v1310 = vpop.f32.mrb[0].mxu0
        %1311 = vmatprep.mubr.bf16.mxu0 0
        %1312 = vmatmul.mubr.bf16.gmra.mrb[0].mxu0 %v774
        %v1313 = vpop.f32.mrb[0].mxu0
        %v1314 = vadd.f32 0.0, %v1313
        %v1315 = vpop.f32.mrb[0].mxu0
        %v1316 = vpop.f32.mrb[0].mxu0
        %v1317 = vadd.f32 0.0, %v1316
        %v1318 = vpop.f32.mrb[0].mxu0
        %1319 = vmatprep.mubr.bf16.mxu0 0
        %1320 = vmatmul.mubr.bf16.gmra.mrb[0].mxu0 %v775
        %v1321 = vpop.f32.mrb[0].mxu0
        %v1322 = vadd.f32 0.0, %v1321
        %v1323 = vpop.f32.mrb[0].mxu0
        %v1324 = vpop.f32.mrb[0].mxu0
        %v1325 = vadd.f32 0.0, %v1324
        %v1326 = vpop.f32.mrb[0].mxu0
        %1327 = vmatprep.mubr.bf16.mxu0 0
        %1328 = vmatmul.mubr.bf16.gmra.mrb[0].mxu0 %v776
        %v1329 = vpop.f32.mrb[0].mxu0
        %v1330 = vadd.f32 0.0, %v1329
        %v1331 = vpop.f32.mrb[0].mxu0
        %v1332 = vpop.f32.mrb[0].mxu0
        %v1333 = vadd.f32 0.0, %v1332
        %v1334 = vpop.f32.mrb[0].mxu0
        %1335 = vmatprep.mubr.bf16.mxu0 0
        %1336 = vmatmul.mubr.bf16.gmra.mrb[0].mxu0 %v777
        %v1337 = vpop.f32.mrb[0].mxu0
        %v1338 = vadd.f32 0.0, %v1337
        %v1339 = vpop.f32.mrb[0].mxu0
        %v1340 = vpop.f32.mrb[0].mxu0
        %v1341 = vadd.f32 0.0, %v1340
        %v1342 = vpop.f32.mrb[0].mxu0
        %1343 = vmatprep.mubr.bf16.mxu0 0
        %1344 = vmatmul.mubr.bf16.gmra.mrb[0].mxu0 %v778
        %v1345 = vpop.f32.mrb[0].mxu0
        %v1346 = vadd.f32 0.0, %v1345
        %v1347 = vpop.f32.mrb[0].mxu0
        %v1348 = vpop.f32.mrb[0].mxu0
        %v1349 = vadd.f32 0.0, %v1348
        %v1350 = vpop.f32.mrb[0].mxu0
        %1351 = vmatprep.mubr.bf16.mxu0 0
        %1352 = vmatmul.mubr.bf16.gmra.mrb[0].mxu0 %v779
        %v1353 = vpop.f32.mrb[0].mxu0
        %v1354 = vadd.f32 0.0, %v1353
        %v1355 = vpop.f32.mrb[0].mxu0
        %v1356 = vpop.f32.mrb[0].mxu0
        %v1357 = vadd.f32 0.0, %v1356
        %v1358 = vpop.f32.mrb[0].mxu0
        %1359 = vmatprep.mubr.bf16.mxu0 0
        %1360 = vmatmul.mubr.bf16.gmra.mrb[0].mxu0 %v780
        %v1361 = vpop.f32.mrb[0].mxu0
        %v1362 = vadd.f32 0.0, %v1361
        %v1363 = vpop.f32.mrb[0].mxu0
        %v1364 = vpop.f32.mrb[0].mxu0
        %v1365 = vadd.f32 0.0, %v1364
        %v1366 = vpop.f32.mrb[0].mxu0
        %1367 = vdwg.mxu0
        %v1368 = vld [vmem:[%s5] sm:$0x1]
        %v1370 = vlaneseq
        %v1371 = vshrl.u32 %v1370, 7
        %v1372 = vsub.s32 0, %v1371
        %v1373 = vrot.slane %v1368, %v1372
        %v1375 = vadd.f32 %v1201, %v1373
        %v1376 = vadd.f32 %v1204, %v1373
        %v1377 = vadd.f32 %v1209, %v1373
        %v1378 = vadd.f32 %v1212, %v1373
        %v1379 = vadd.f32 %v1217, %v1373
        %v1380 = vadd.f32 %v1220, %v1373
        %v1381 = vadd.f32 %v1225, %v1373
        %v1382 = vadd.f32 %v1228, %v1373
        %v1383 = vadd.f32 %v1233, %v1373
        %v1384 = vadd.f32 %v1236, %v1373
        %v1385 = vadd.f32 %v1241, %v1373
        %v1386 = vadd.f32 %v1244, %v1373
        %v1387 = vadd.f32 %v1249, %v1373
        %v1388 = vadd.f32 %v1252, %v1373
        %v1389 = vadd.f32 %v1257, %v1373
        %v1390 = vadd.f32 %v1260, %v1373
        %v1391 = vadd.f32 %v1306, %v1373
        %v1392 = vadd.f32 %v1309, %v1373
        %v1393 = vadd.f32 %v1314, %v1373
        %v1394 = vadd.f32 %v1317, %v1373
        %v1395 = vadd.f32 %v1322, %v1373
        %v1396 = vadd.f32 %v1325, %v1373
        %v1397 = vadd.f32 %v1330, %v1373
        %v1398 = vadd.f32 %v1333, %v1373
        %v1399 = vadd.f32 %v1338, %v1373
        %v1400 = vadd.f32 %v1341, %v1373
        %v1401 = vadd.f32 %v1346, %v1373
        %v1402 = vadd.f32 %v1349, %v1373
        %v1403 = vadd.f32 %v1354, %v1373
        %v1404 = vadd.f32 %v1357, %v1373
        %v1405 = vadd.f32 %v1362, %v1373
        %v1406 = vadd.f32 %v1365, %v1373
        %v1407 = vmax.f32 %v1375, 0.0
        %v1408 = vmax.f32 %v1376, 0.0
        %v1409 = vmax.f32 %v1377, 0.0
        %v1410 = vmax.f32 %v1378, 0.0
        %v1411 = vmax.f32 %v1379, 0.0
        %v1412 = vmax.f32 %v1380, 0.0
        %v1413 = vmax.f32 %v1381, 0.0
        %v1414 = vmax.f32 %v1382, 0.0
        %v1415 = vmax.f32 %v1383, 0.0
        %v1416 = vmax.f32 %v1384, 0.0
        %v1417 = vmax.f32 %v1385, 0.0
        %v1418 = vmax.f32 %v1386, 0.0
        %v1419 = vmax.f32 %v1387, 0.0
        %v1420 = vmax.f32 %v1388, 0.0
        %v1421 = vmax.f32 %v1389, 0.0
        %v1422 = vmax.f32 %v1390, 0.0
        %v1423 = vmax.f32 %v1391, 0.0
        %v1424 = vmax.f32 %v1392, 0.0
        %v1425 = vmax.f32 %v1393, 0.0
        %v1426 = vmax.f32 %v1394, 0.0
        %v1427 = vmax.f32 %v1395, 0.0
        %v1428 = vmax.f32 %v1396, 0.0
        %v1429 = vmax.f32 %v1397, 0.0
        %v1430 = vmax.f32 %v1398, 0.0
        %v1431 = vmax.f32 %v1399, 0.0
        %v1432 = vmax.f32 %v1400, 0.0
        %v1433 = vmax.f32 %v1401, 0.0
        %v1434 = vmax.f32 %v1402, 0.0
        %v1435 = vmax.f32 %v1403, 0.0
        %v1436 = vmax.f32 %v1404, 0.0
        %v1437 = vmax.f32 %v1405, 0.0
        %v1438 = vmax.f32 %v1406, 0.0
        %v1439 = vpack.c.bf16 %v1408, %v1407
        %v1440 = vpack.c.bf16 %v1410, %v1409
        %v1441 = vpack.c.bf16 %v1412, %v1411
        %v1442 = vpack.c.bf16 %v1414, %v1413
        %v1443 = vpack.c.bf16 %v1416, %v1415
        %v1444 = vpack.c.bf16 %v1418, %v1417
        %v1445 = vpack.c.bf16 %v1420, %v1419
        %v1446 = vpack.c.bf16 %v1422, %v1421
        %v1447 = vpack.c.bf16 %v1424, %v1423
        %v1448 = vpack.c.bf16 %v1426, %v1425
        %v1449 = vpack.c.bf16 %v1428, %v1427
        %v1450 = vpack.c.bf16 %v1430, %v1429
        %v1451 = vpack.c.bf16 %v1432, %v1431
        %v1452 = vpack.c.bf16 %v1434, %v1433
        %v1453 = vpack.c.bf16 %v1436, %v1435
        %v1454 = vpack.c.bf16 %v1438, %v1437
        %v1455 = vld [vmem:[#allocation5] sm:$0xff]
        %v1456 = vld [vmem:[#allocation5 + $0x8] sm:$0xff]
        %v1457 = vld [vmem:[#allocation5 + $0x10] sm:$0xff]
        %v1458 = vld [vmem:[#allocation5 + $0x18] sm:$0xff]
        %v1459 = vld [vmem:[#allocation5 + $0x20] sm:$0xff]
        %v1460 = vld [vmem:[#allocation5 + $0x28] sm:$0xff]
        %v1461 = vld [vmem:[#allocation5 + $0x30] sm:$0xff]
        %v1462 = vld [vmem:[#allocation5 + $0x38] sm:$0xff]
        %v1463 = vld [vmem:[#allocation5 + $0x40] sm:$0xff]
        %v1464 = vld [vmem:[#allocation5 + $0x48] sm:$0xff]
        %v1465 = vld [vmem:[#allocation5 + $0x50] sm:$0xff]
        %v1466 = vld [vmem:[#allocation5 + $0x58] sm:$0xff]
        %v1467 = vld [vmem:[#allocation5 + $0x60] sm:$0xff]
        %v1468 = vld [vmem:[#allocation5 + $0x68] sm:$0xff]
        %v1469 = vld [vmem:[#allocation5 + $0x70] sm:$0xff]
        %v1470 = vld [vmem:[#allocation5 + $0x78] sm:$0xff]
        %v1471 = vpack.c.bf16 %v1456, %v1455
        %v1472 = vpack.c.bf16 %v1458, %v1457
        %v1473 = vpack.c.bf16 %v1460, %v1459
        %v1474 = vpack.c.bf16 %v1462, %v1461
        %v1475 = vpack.c.bf16 %v1464, %v1463
        %v1476 = vpack.c.bf16 %v1466, %v1465
        %v1477 = vpack.c.bf16 %v1468, %v1467
        %v1478 = vpack.c.bf16 %v1470, %v1469
        %v1479 = vld [vmem:[%s7] sm:$0x1]
        %v1481 = vlaneseq
        %v1482 = vshrl.u32 %v1481, 7
        %v1483 = vsub.s32 0, %v1482
        %v1484 = vrot.slane %v1479, %v1483
        %1486 = vmatprep.subr.bf16.mxu0 0
        %1487 = vmatpush1.bf16.msra.mxu0 %v1471
        %1488 = vmatprep.subr.bf16.mxu0 0
        %1489 = vmatpush1.bf16.msra.mxu0 %v1472
        %1490 = vmatprep.subr.bf16.mxu0 0
        %1491 = vmatpush1.bf16.msra.mxu0 %v1473
        %1492 = vmatprep.subr.bf16.mxu0 0
        %1493 = vmatpush1.bf16.msra.mxu0 %v1474
        %1494 = vmatprep.subr.bf16.mxu0 0
        %1495 = vmatpush1.bf16.msra.mxu0 %v1475
        %1496 = vmatprep.subr.bf16.mxu0 0
        %1497 = vmatpush1.bf16.msra.mxu0 %v1476
        %1498 = vmatprep.subr.bf16.mxu0 0
        %1499 = vmatpush1.bf16.msra.mxu0 %v1477
        %1500 = vmatprep.subr.bf16.mxu0 0
        %1501 = vmatpush1.bf16.msra.mxu0 %v1478
        %1502 = vmatprep.subr.bf16.mxu0 0
        %1503 = vmatpush1.bf16.msra.mxu0 0
        %1504 = vmatprep.subr.bf16.mxu0 0
        %1505 = vmatpush1.bf16.msra.mxu0 0
        %1506 = vmatprep.subr.bf16.mxu0 0
        %1507 = vmatpush1.bf16.msra.mxu0 0
        %1508 = vmatprep.subr.bf16.mxu0 0
        %1509 = vmatpush1.bf16.msra.mxu0 0
        %1510 = vmatprep.subr.bf16.mxu0 0
        %1511 = vmatpush1.bf16.msra.mxu0 0
        %1512 = vmatprep.subr.bf16.mxu0 0
        %1513 = vmatpush1.bf16.msra.mxu0 0
        %1514 = vmatprep.subr.bf16.mxu0 0
        %1515 = vmatpush1.bf16.msra.mxu0 0
        %1516 = vmatprep.subr.bf16.mxu0 0
        %1517 = vmatpush1.bf16.msra.mxu0 0
        %1518 = vmatprep.mubr.bf16.mxu0 0
        %1519 = vmatmul.mubr.bf16.gmra.mrb[0].mxu0 %v1439
        %v1520 = vpop.f32.mrb[0].mxu0
        %v1521 = vadd.f32 %v1484, %v1520
        %v1522 = vpop.f32.mrb[0].mxu0
        %v1523 = vpop.f32.mrb[0].mxu0
        %v1524 = vadd.f32 %v1484, %v1523
        %v1525 = vpop.f32.mrb[0].mxu0
        %1526 = vmatprep.mubr.bf16.mxu0 0
        %1527 = vmatmul.mubr.bf16.gmra.mrb[0].mxu0 %v1440
        %v1528 = vpop.f32.mrb[0].mxu0
        %v1529 = vadd.f32 %v1484, %v1528
        %v1530 = vpop.f32.mrb[0].mxu0
        %v1531 = vpop.f32.mrb[0].mxu0
        %v1532 = vadd.f32 %v1484, %v1531
        %v1533 = vpop.f32.mrb[0].mxu0
        %1534 = vmatprep.mubr.bf16.mxu0 0
        %1535 = vmatmul.mubr.bf16.gmra.mrb[0].mxu0 %v1441
        %v1536 = vpop.f32.mrb[0].mxu0
        %v1537 = vadd.f32 %v1484, %v1536
        %v1538 = vpop.f32.mrb[0].mxu0
        %v1539 = vpop.f32.mrb[0].mxu0
        %v1540 = vadd.f32 %v1484, %v1539
        %v1541 = vpop.f32.mrb[0].mxu0
        %1542 = vmatprep.mubr.bf16.mxu0 0
        %1543 = vmatmul.mubr.bf16.gmra.mrb[0].mxu0 %v1442
        %v1544 = vpop.f32.mrb[0].mxu0
        %v1545 = vadd.f32 %v1484, %v1544
        %v1546 = vpop.f32.mrb[0].mxu0
        %v1547 = vpop.f32.mrb[0].mxu0
        %v1548 = vadd.f32 %v1484, %v1547
        %v1549 = vpop.f32.mrb[0].mxu0
        %1550 = vmatprep.mubr.bf16.mxu0 0
        %1551 = vmatmul.mubr.bf16.gmra.mrb[0].mxu0 %v1443
        %v1552 = vpop.f32.mrb[0].mxu0
        %v1553 = vadd.f32 %v1484, %v1552
        %v1554 = vpop.f32.mrb[0].mxu0
        %v1555 = vpop.f32.mrb[0].mxu0
        %v1556 = vadd.f32 %v1484, %v1555
        %v1557 = vpop.f32.mrb[0].mxu0
        %1558 = vmatprep.mubr.bf16.mxu0 0
        %1559 = vmatmul.mubr.bf16.gmra.mrb[0].mxu0 %v1444
        %v1560 = vpop.f32.mrb[0].mxu0
        %v1561 = vadd.f32 %v1484, %v1560
        %v1562 = vpop.f32.mrb[0].mxu0
        %v1563 = vpop.f32.mrb[0].mxu0
        %v1564 = vadd.f32 %v1484, %v1563
        %v1565 = vpop.f32.mrb[0].mxu0
        %1566 = vmatprep.mubr.bf16.mxu0 0
        %1567 = vmatmul.mubr.bf16.gmra.mrb[0].mxu0 %v1445
        %v1568 = vpop.f32.mrb[0].mxu0
        %v1569 = vadd.f32 %v1484, %v1568
        %v1570 = vpop.f32.mrb[0].mxu0
        %v1571 = vpop.f32.mrb[0].mxu0
        %v1572 = vadd.f32 %v1484, %v1571
        %v1573 = vpop.f32.mrb[0].mxu0
        %1574 = vmatprep.mubr.bf16.mxu0 0
        %1575 = vmatmul.mubr.bf16.gmra.mrb[0].mxu0 %v1446
        %v1576 = vpop.f32.mrb[0].mxu0
        %v1577 = vadd.f32 %v1484, %v1576
        %v1578 = vpop.f32.mrb[0].mxu0
        %v1579 = vpop.f32.mrb[0].mxu0
        %v1580 = vadd.f32 %v1484, %v1579
        %v1581 = vpop.f32.mrb[0].mxu0
        %1582 = vmatprep.mubr.bf16.mxu0 0
        %1583 = vmatmul.mubr.bf16.gmra.mrb[0].mxu0 %v1447
        %v1584 = vpop.f32.mrb[0].mxu0
        %v1585 = vadd.f32 %v1484, %v1584
        %v1586 = vpop.f32.mrb[0].mxu0
        %v1587 = vpop.f32.mrb[0].mxu0
        %v1588 = vadd.f32 %v1484, %v1587
        %v1589 = vpop.f32.mrb[0].mxu0
        %1590 = vmatprep.mubr.bf16.mxu0 0
        %1591 = vmatmul.mubr.bf16.gmra.mrb[0].mxu0 %v1448
        %v1592 = vpop.f32.mrb[0].mxu0
        %v1593 = vadd.f32 %v1484, %v1592
        %v1594 = vpop.f32.mrb[0].mxu0
        %v1595 = vpop.f32.mrb[0].mxu0
        %v1596 = vadd.f32 %v1484, %v1595
        %v1597 = vpop.f32.mrb[0].mxu0
        %1598 = vmatprep.mubr.bf16.mxu0 0
        %1599 = vmatmul.mubr.bf16.gmra.mrb[0].mxu0 %v1449
        %v1600 = vpop.f32.mrb[0].mxu0
        %v1601 = vadd.f32 %v1484, %v1600
        %v1602 = vpop.f32.mrb[0].mxu0
        %v1603 = vpop.f32.mrb[0].mxu0
        %v1604 = vadd.f32 %v1484, %v1603
        %v1605 = vpop.f32.mrb[0].mxu0
        %1606 = vmatprep.mubr.bf16.mxu0 0
        %1607 = vmatmul.mubr.bf16.gmra.mrb[0].mxu0 %v1450
        %v1608 = vpop.f32.mrb[0].mxu0
        %v1609 = vadd.f32 %v1484, %v1608
        %v1610 = vpop.f32.mrb[0].mxu0
        %v1611 = vpop.f32.mrb[0].mxu0
        %v1612 = vadd.f32 %v1484, %v1611
        %v1613 = vpop.f32.mrb[0].mxu0
        %1614 = vmatprep.mubr.bf16.mxu0 0
        %1615 = vmatmul.mubr.bf16.gmra.mrb[0].mxu0 %v1451
        %v1616 = vpop.f32.mrb[0].mxu0
        %v1617 = vadd.f32 %v1484, %v1616
        %v1618 = vpop.f32.mrb[0].mxu0
        %v1619 = vpop.f32.mrb[0].mxu0
        %v1620 = vadd.f32 %v1484, %v1619
        %v1621 = vpop.f32.mrb[0].mxu0
        %1622 = vmatprep.mubr.bf16.mxu0 0
        %1623 = vmatmul.mubr.bf16.gmra.mrb[0].mxu0 %v1452
        %v1624 = vpop.f32.mrb[0].mxu0
        %v1625 = vadd.f32 %v1484, %v1624
        %v1626 = vpop.f32.mrb[0].mxu0
        %v1627 = vpop.f32.mrb[0].mxu0
        %v1628 = vadd.f32 %v1484, %v1627
        %v1629 = vpop.f32.mrb[0].mxu0
        %1630 = vmatprep.mubr.bf16.mxu0 0
        %1631 = vmatmul.mubr.bf16.gmra.mrb[0].mxu0 %v1453
        %v1632 = vpop.f32.mrb[0].mxu0
        %v1633 = vadd.f32 %v1484, %v1632
        %v1634 = vpop.f32.mrb[0].mxu0
        %v1635 = vpop.f32.mrb[0].mxu0
        %v1636 = vadd.f32 %v1484, %v1635
        %v1637 = vpop.f32.mrb[0].mxu0
        %1638 = vmatprep.mubr.bf16.mxu0 0
        %1639 = vmatmul.mubr.bf16.gmra.mrb[0].mxu0 %v1454
        %v1640 = vpop.f32.mrb[0].mxu0
        %v1641 = vadd.f32 %v1484, %v1640
        %v1642 = vpop.f32.mrb[0].mxu0
        %v1643 = vpop.f32.mrb[0].mxu0
        %v1644 = vadd.f32 %v1484, %v1643
        %v1645 = vpop.f32.mrb[0].mxu0
        %1646 = vdwg.mxu0
        %v1647 = vpack.c.bf16 %v1524, %v1521
        %v1648 = vpack.c.bf16 %v1532, %v1529
        %v1649 = vpack.c.bf16 %v1540, %v1537
        %v1650 = vpack.c.bf16 %v1548, %v1545
        %v1651 = vpack.c.bf16 %v1556, %v1553
        %v1652 = vpack.c.bf16 %v1564, %v1561
        %v1653 = vpack.c.bf16 %v1572, %v1569
        %v1654 = vpack.c.bf16 %v1580, %v1577
        %v1655 = vpack.c.bf16 %v1588, %v1585
        %v1656 = vpack.c.bf16 %v1596, %v1593
        %v1657 = vpack.c.bf16 %v1604, %v1601
        %v1658 = vpack.c.bf16 %v1612, %v1609
        %v1659 = vpack.c.bf16 %v1620, %v1617
        %v1660 = vpack.c.bf16 %v1628, %v1625
        %v1661 = vpack.c.bf16 %v1636, %v1633
        %v1662 = vpack.c.bf16 %v1644, %v1641
        %v1679 = vunpack.c.l.b16 %v1647
        %v1680 = vunpack.c.h.b16 %v1647
        %v1681 = vunpack.c.l.b16 %v1648
        %v1682 = vunpack.c.h.b16 %v1648
        %v1683 = vunpack.c.l.b16 %v1649
        %v1684 = vunpack.c.h.b16 %v1649
        %v1685 = vunpack.c.l.b16 %v1650
        %v1686 = vunpack.c.h.b16 %v1650
        %v1687 = vunpack.c.l.b16 %v1651
        %v1688 = vunpack.c.h.b16 %v1651
        %v1689 = vunpack.c.l.b16 %v1652
        %v1690 = vunpack.c.h.b16 %v1652
        %v1691 = vunpack.c.l.b16 %v1653
        %v1692 = vunpack.c.h.b16 %v1653
        %v1693 = vunpack.c.l.b16 %v1654
        %v1694 = vunpack.c.h.b16 %v1654
        %v1695 = vunpack.c.l.b16 %v1655
        %v1696 = vunpack.c.h.b16 %v1655
        %v1697 = vunpack.c.l.b16 %v1656
        %v1698 = vunpack.c.h.b16 %v1656
        %v1699 = vunpack.c.l.b16 %v1657
        %v1700 = vunpack.c.h.b16 %v1657
        %v1701 = vunpack.c.l.b16 %v1658
        %v1702 = vunpack.c.h.b16 %v1658
        %v1703 = vunpack.c.l.b16 %v1659
        %v1704 = vunpack.c.h.b16 %v1659
        %v1705 = vunpack.c.l.b16 %v1660
        %v1706 = vunpack.c.h.b16 %v1660
        %v1707 = vunpack.c.l.b16 %v1661
        %v1708 = vunpack.c.h.b16 %v1661
        %v1709 = vunpack.c.l.b16 %v1662
        %v1710 = vunpack.c.h.b16 %v1662
        %v1711 = vpack.c.b16 %v1679, %v1679
        %v1712 = vpack.c.b16 %v1680, %v1680
        %v1713 = vpack.c.b16 %v1681, %v1681
        %v1714 = vpack.c.b16 %v1682, %v1682
        %v1715 = vpack.c.b16 %v1683, %v1683
        %v1716 = vpack.c.b16 %v1684, %v1684
        %v1717 = vpack.c.b16 %v1685, %v1685
        %v1718 = vpack.c.b16 %v1686, %v1686
        %v1719 = vpack.c.b16 %v1687, %v1687
        %v1720 = vpack.c.b16 %v1688, %v1688
        %v1721 = vpack.c.b16 %v1689, %v1689
        %v1722 = vpack.c.b16 %v1690, %v1690
        %v1723 = vpack.c.b16 %v1691, %v1691
        %v1724 = vpack.c.b16 %v1692, %v1692
        %v1725 = vpack.c.b16 %v1693, %v1693
        %v1726 = vpack.c.b16 %v1694, %v1694
        %v1727 = vpack.c.b16 %v1695, %v1695
        %v1728 = vpack.c.b16 %v1696, %v1696
        %v1729 = vpack.c.b16 %v1697, %v1697
        %v1730 = vpack.c.b16 %v1698, %v1698
        %v1731 = vpack.c.b16 %v1699, %v1699
        %v1732 = vpack.c.b16 %v1700, %v1700
        %v1733 = vpack.c.b16 %v1701, %v1701
        %v1734 = vpack.c.b16 %v1702, %v1702
        %v1735 = vpack.c.b16 %v1703, %v1703
        %v1736 = vpack.c.b16 %v1704, %v1704
        %v1737 = vpack.c.b16 %v1705, %v1705
        %v1738 = vpack.c.b16 %v1706, %v1706
        %v1739 = vpack.c.b16 %v1707, %v1707
        %v1740 = vpack.c.b16 %v1708, %v1708
        %v1741 = vpack.c.b16 %v1709, %v1709
        %v1742 = vpack.c.b16 %v1710, %v1710
        %1775 = vst [vmem:[%s347] sm:$0xf] %v1711
        %1776 = vst [vmem:[%s347 + $0x4] sm:$0xf] %v1712
        %1777 = vst [vmem:[%s347 + $0x8] sm:$0xf] %v1713
        %1778 = vst [vmem:[%s347 + $0xc] sm:$0xf] %v1714
        %1779 = vst [vmem:[%s347 + $0x10] sm:$0xf] %v1715
        %1780 = vst [vmem:[%s347 + $0x14] sm:$0xf] %v1716
        %1781 = vst [vmem:[%s347 + $0x18] sm:$0xf] %v1717
        %1782 = vst [vmem:[%s347 + $0x1c] sm:$0xf] %v1718
        %1783 = vst [vmem:[%s347 + $0x20] sm:$0xf] %v1719
        %1784 = vst [vmem:[%s347 + $0x24] sm:$0xf] %v1720
        %1785 = vst [vmem:[%s347 + $0x28] sm:$0xf] %v1721
        %1786 = vst [vmem:[%s347 + $0x2c] sm:$0xf] %v1722
        %1787 = vst [vmem:[%s347 + $0x30] sm:$0xf] %v1723
        %1788 = vst [vmem:[%s347 + $0x34] sm:$0xf] %v1724
        %1789 = vst [vmem:[%s347 + $0x38] sm:$0xf] %v1725
        %1790 = vst [vmem:[%s347 + $0x3c] sm:$0xf] %v1726
        %1791 = vst [vmem:[%s347 + $0x40] sm:$0xf] %v1727
        %1792 = vst [vmem:[%s347 + $0x44] sm:$0xf] %v1728
        %1793 = vst [vmem:[%s347 + $0x48] sm:$0xf] %v1729
        %1794 = vst [vmem:[%s347 + $0x4c] sm:$0xf] %v1730
        %1795 = vst [vmem:[%s347 + $0x50] sm:$0xf] %v1731
        %1796 = vst [vmem:[%s347 + $0x54] sm:$0xf] %v1732
        %1797 = vst [vmem:[%s347 + $0x58] sm:$0xf] %v1733
        %1798 = vst [vmem:[%s347 + $0x5c] sm:$0xf] %v1734
        %1799 = vst [vmem:[%s347 + $0x60] sm:$0xf] %v1735
        %1800 = vst [vmem:[%s347 + $0x64] sm:$0xf] %v1736
        %1801 = vst [vmem:[%s347 + $0x68] sm:$0xf] %v1737
        %1802 = vst [vmem:[%s347 + $0x6c] sm:$0xf] %v1738
        %1803 = vst [vmem:[%s347 + $0x70] sm:$0xf] %v1739
        %1804 = vst [vmem:[%s347 + $0x74] sm:$0xf] %v1740
        %1805 = vst [vmem:[%s347 + $0x78] sm:$0xf] %v1741
        %1806 = vst [vmem:[%s347 + $0x7c] sm:$0xf] %v1742
        %s1807 = sand.u32 %s210, 1
        %s1808 = scalar_lea.sflag [#allocation4], %s1807
        %s1809 = sand.u32 %s210, 1
        %s1810 = smul.addr %s1809, 128
        %s1811 = scalar_lea.vmem [#allocation7], %s1810
        // Predicated region
        $region61: #{tpu_custom_call.1} parent=51 // pred_check
          %p1812 = pneg %p220
        $region62: #{tpu_custom_call.1} parent=51 // pred_check_branch
          %1814 = sbr.rel (%p1812) target = $region64
        $region63: #{tpu_custom_call.1} parent=51 // pred_region
          %s1815 = smul.u32 32, %s24
          %s1817 = ssub.s32 2048, 2048
          %1818 = vsyncadd %s1808, %s1817
          %s1819 = smul.addr %s1815, 64
          %s1820 = scalar_lea.hbm %s8, %s1819
          %s1821 = sshll.u32 %s1811, 4
          %s1822 = int_to_ptr.vmem [resolvable:$true] %s1821
          %1827 = dma.vmem_to_hbm [thread:$0]  %s1822, 2048, %s1820, %s1808, 64, 64, 4
        $region64: #{tpu_custom_call.1} parent=51 // pred_fallthru
          _
      $region52: #{tpu_custom_call.1} parent=5 // pred_fallthru
        _
      %p1828 = scmp.le.s32.totalorder 2, %s19
      // Predicated region
      $region65: #{tpu_custom_call.1} parent=5 // pred_check
        %p1829 = pneg %p1828
      $region66: #{tpu_custom_call.1} parent=5 // pred_check_branch
        %1831 = sbr.rel (%p1829) target = $region68
      $region67: #{tpu_custom_call.1} parent=5 // pred_region
        %s1832 = ssub.s32 %s19, 2
        // Predicated region
        $region69: #{tpu_custom_call.1} parent=67 // pred_check
          %p1833 = pneg %p226
        $region70: #{tpu_custom_call.1} parent=67 // pred_check_branch
          %1835 = sbr.rel (%p1833) target = $region72
        $region71: #{tpu_custom_call.1} parent=67 // pred_region
          %s1836 = sand.u32 %s211, 1
          %s1837 = scalar_lea.sflag [#allocation4], %s1836
          %s1838 = sand.u32 %s211, 1
          %s1839 = smul.addr %s1838, 128
          %s1840 = scalar_lea.vmem [#allocation7], %s1839
          %1841 = dma.done %s1837, 2048
        $region72: #{tpu_custom_call.1} parent=67 // pred_fallthru
          _
      $region68: #{tpu_custom_call.1} parent=5 // pred_fallthru
        _
    $region6: #{tpu_custom_call.1} parent=1 // loop_footer
      %s23 = sadd.s32 1, %s19
    $region7: #{tpu_custom_call.1} parent=1 // loop_footer_branch
      %18 = sbr.rel target = $region3
    $region8: #{tpu_custom_call.1} parent=1 // loop_exit
      _
    %1842 = vsyncpa [#allocation3], 1
    %s1843 = scalar_lea.sflag [#allocation3], 1
    %1844 = vsyncpa %s1843, 1
    %1845 = vsyncpa [#allocation6], 1
    %1846 = vsyncpa [#allocation4], 1
    %s1847 = scalar_lea.sflag [#allocation4], 1
    %1848 = vsyncpa %s1847, 1

</llo_original>
